<compile_context>
chip_gen: v7x
topology: tpu7x:2x2x1
jax: 0.10.0
libtpu: 0.0.40
codegen_flags: <defaults>
</compile_context>

<pallas_src>
import numpy as np
import jax
import jax.numpy as jnp
from jax.experimental import pallas as pl
from jax.experimental.pallas import tpu as pltpu


# ---------------------------------------------------------------------------
# Fused whole-encoder Pallas kernel
# ---------------------------------------------------------------------------
def _make_encoder_kernel(cfgs, batch):
    """cfgs: list of per-block dicts of *static* Python ints."""
    L = len(cfgs)

    def kernel(*refs):
        x_ref = refs[0]
        w_refs = [refs[1 + 2 * l] for l in range(L)]         # (kh, Win*Cin, Wout*Cout)
        p_refs = [refs[2 + 2 * l] for l in range(L)]         # (3, Wout*Cout)
        out_refs = [refs[1 + 2 * L + l] for l in range(L)]   # (B, Hout, Wout*Cout)
        act_refs = [refs[1 + 3 * L + l] for l in range(L)]   # (B, Hin+2*ph, Win*Cin)

        # Zero the padded activation buffers (halo rows must be zero; interiors
        # are overwritten below).  Buffers are tiny, so zero them whole.
        for s_ref in act_refs:
            s_ref[...] = jnp.zeros(s_ref.shape, s_ref.dtype)

        # Stage the encoder input into block 0's padded activation buffer.
        c0 = cfgs[0]
        act_refs[0][:, c0["ph"]:c0["ph"] + c0["h_in"], :] = x_ref[...]

        for l, c in enumerate(cfgs):
            n_out = c["w_out"] * c["cout"]
            for b in range(batch):                  # static unroll (B is small)
                acc = jnp.zeros((c["h_out"], n_out), jnp.float32)
                for i in range(c["kh"]):            # vertical taps: shifted-row matmuls
                    acc = acc + jnp.dot(
                        act_refs[l][b, i:i + c["h_out"], :],
                        w_refs[l][i],
                        preferred_element_type=jnp.float32,
                    )
                # folded conv-bias + BatchNorm(eval) affine, then per-channel PReLU
                y = acc * p_refs[l][0:1, :] + p_refs[l][1:2, :]
                y = jnp.where(y > 0, y, p_refs[l][2:3, :] * y)
                # TODO(synk): Dropout is identity here (eval mode); training-mode
                # dropout (p=0.2 on every 3rd block) is not reproduced.
                out_refs[l][b, :, :] = y
                if l + 1 < L:                       # feed next block (stays in VMEM)
                    ph_n = cfgs[l + 1]["ph"]
                    act_refs[l + 1][b, ph_n:ph_n + c["h_out"], :] = y

    return kernel


# ---------------------------------------------------------------------------
# Host-side glue: static geometry + weight repacking (weights only, tiny)
# ---------------------------------------------------------------------------
def _block_configs(B, C0, H0, W0, c_list, k_h_en, k_w, p_h_en):
    cfgs = []
    cin, h_in, w_in = C0, H0, W0
    pw = k_w // 2
    for l in range(len(c_list)):
        cout, kh, ph = c_list[l], k_h_en[l], p_h_en[l]
        h_out = h_in + 2 * ph - kh + 1           # stride 1 along H
        w_out = (w_in + 2 * pw - k_w) // 2 + 1   # stride 2 along W
        cfgs.append(dict(cin=cin, cout=cout, kh=kh, kw=k_w, ph=ph, pw=pw,
                         h_in=h_in, w_in=w_in, h_out=h_out, w_out=w_out))
        cin, h_in, w_in = cout, h_out, w_out
    return cfgs


def _pack_block_params(p, cfg):
    """Toeplitz-expand the conv weight along the strided W axis and fold
    conv bias + eval-mode BatchNorm + PReLU slope into a packed (3, N) array."""
    kh, kw = cfg["kh"], cfg["kw"]
    cin, cout = cfg["cin"], cfg["cout"]
    w_in, w_out, pw = cfg["w_in"], cfg["w_out"], cfg["pw"]

    # T[j, wo, wi] = 1  iff  wi == 2*wo + j - pw  (and wi is in range)
    T = np.zeros((kw, w_out, w_in), np.float32)
    for j in range(kw):
        for wo in range(w_out):
            wi = 2 * wo + j - pw
            if 0 <= wi < w_in:
                T[j, wo, wi] = 1.0

    # Wbig[i, wi*Cin+ci, wo*Cout+co] = W[co, ci, i, j]  with  wi = 2*wo + j - pw
    wbig = jnp.einsum("jpw,ocij->iwcpo", jnp.asarray(T), p["weight"])
    wbig = wbig.reshape(kh, w_in * cin, w_out * cout)

    eps = 1e-5
    s = p["gamma"] / jnp.sqrt(p["var"] + eps)
    bias_total = (p["bias"] - p["mean"]) * s + p["beta"]
    prm = jnp.stack([jnp.tile(s, w_out),
                     jnp.tile(bias_total, w_out),
                     jnp.tile(p["alpha"], w_out)], axis=0)   # (3, Wout*Cout)
    return wbig, prm


# ---------------------------------------------------------------------------
# Encoder forward (single fused pallas_call)
# ---------------------------------------------------------------------------
def encoder_forward(inpt, params, c_list, k_h_en, k_w, p_h_en):
    if inpt.ndim == 3:
        x4 = inpt[:, None, :, :]
    elif inpt.ndim == 4:
        x4 = inpt
    else:
        raise SyntaxError("The size of inpt tensor is not valid!")

    B, C0, H0, W0 = x4.shape
    cfgs = _block_configs(B, C0, H0, W0, c_list, k_h_en, k_w, p_h_en)

    flat_inputs = []
    for l, cfg in enumerate(cfgs):
        wbig, prm = _pack_block_params(params[l], cfg)
        flat_inputs += [wbig, prm]

    # kernel activation layout: (B, H, W*C), channel fastest
    x0 = jnp.transpose(x4, (0, 2, 3, 1)).reshape(B, H0, W0 * C0)

    out_shapes = tuple(
        jax.ShapeDtypeStruct((B, c["h_out"], c["w_out"] * c["cout"]), jnp.float32)
        for c in cfgs)
    scratch_shapes = [
        pltpu.VMEM((B, c["h_in"] + 2 * c["ph"], c["w_in"] * c["cin"]), jnp.float32)
        for c in cfgs]

    outs = pl.pallas_call(
        _make_encoder_kernel(cfgs, B),
        out_shape=out_shapes,
        scratch_shapes=scratch_shapes,
    )(x0, *flat_inputs)

    # back to the PyTorch NCHW API layout (tiny arrays; one transpose each)
    x_list = []
    for out, c in zip(outs, cfgs):
        y = out.reshape(B, c["h_out"], c["w_out"], c["cout"]).transpose(0, 3, 1, 2)
        x_list.append(y)
    return x_list[-1], x_list


# ---------------------------------------------------------------------------
# Deterministic parameter init (synthetic; shapes from the module __init__)
# ---------------------------------------------------------------------------
def _spectral_normalize(w, n_iter=10):
    # deterministic power iteration (PyTorch SpectralNorm uses 1 iter + random u)
    cout = w.shape[0]
    wm = w.reshape(cout, -1)
    u = jnp.ones((cout,), jnp.float32)
    v = jnp.ones((wm.shape[1],), jnp.float32)
    for _ in range(n_iter):
        v = wm.T @ u
        v = v / (jnp.linalg.norm(v) + 1e-12)
        u = wm @ v
        u = u / (jnp.linalg.norm(u) + 1e-12)
    sigma = u @ (wm @ v)
    return w / sigma


def init_encoder_params(key, c_list, k_h_en, k_w):
    cin_list = [1] + c_list[:-1]
    params = []
    for i in range(len(c_list)):
        cin, cout, kh = cin_list[i], c_list[i], k_h_en[i]
        key, kw_, kb, kg, kbt, km, kv = jax.random.split(key, 7)
        w = 0.1 * jax.random.normal(kw_, (cout, cin, kh, k_w), jnp.float32)
        params.append(dict(
            weight=_spectral_normalize(w),
            bias=0.1 * jax.random.normal(kb, (cout,), jnp.float32),
            gamma=1.0 + 0.1 * jax.random.normal(kg, (cout,), jnp.float32),
            beta=0.1 * jax.random.normal(kbt, (cout,), jnp.float32),
            mean=0.1 * jax.random.normal(km, (cout,), jnp.float32),
            var=1.0 + 0.1 * jnp.abs(jax.random.normal(kv, (cout,), jnp.float32)),
            alpha=jnp.full((cout,), 0.25, jnp.float32),   # PReLU default init
        ))
    return params


# ---------------------------------------------------------------------------
# Pure-JAX (XLA conv) reference of the same eval-mode math
# ---------------------------------------------------------------------------
def _reference_encoder(inpt, params, c_list, k_h_en, k_w, p_h_en):
    x = inpt if inpt.ndim == 4 else inpt[:, None, :, :]
    eps = 1e-5
    xs = []
    for i in range(len(c_list)):
        p = params[i]
        ph, pw = p_h_en[i], k_w // 2
        y = jax.lax.conv_general_dilated(
            x, p["weight"], window_strides=(1, 2),
            padding=((ph, ph), (pw, pw)),
            dimension_numbers=("NCHW", "OIHW", "NCHW"),
            precision=jax.lax.Precision.HIGHEST)
        y = y + p["bias"][None, :, None, None]
        s = (p["gamma"] / jnp.sqrt(p["var"] + eps))[None, :, None, None]
        y = (y - p["mean"][None, :, None, None]) * s + p["beta"][None, :, None, None]
        y = jnp.where(y > 0, y, p["alpha"][None, :, None, None] * y)
        xs.append(y)
        x = y
    return x, xs


if __name__ == "__main__":
    # small Encoder config: 3 blocks, channels 1 -> 4 -> 8 -> 16
    c_list = [4, 8, 16]
    k_h_en = [3, 3, 3]
    k_w = 3
    p_h_en = [1, 1, 1]

    key = jax.random.PRNGKey(0)
    kx, kp = jax.random.split(key)
    x = jax.random.normal(kx, (2, 1, 16, 16), jnp.float32)   # NCHW
    params = init_encoder_params(kp, c_list, k_h_en, k_w)

    fwd = jax.jit(lambda inp, prm: encoder_forward(inp, prm, c_list, k_h_en, k_w, p_h_en))
    out, x_list = fwd(x, params)
    out = jax.block_until_ready(out)
    for t in x_list:
        jax.block_until_ready(t)

    assert out.shape == (2, 16, 16, 2)            # W halves each block: 16->8->4->2
    assert [t.shape for t in x_list] == [(2, 4, 16, 8), (2, 8, 16, 4), (2, 16, 16, 2)]

    # numerical check against a pure-JAX reference of the same eval-mode math
    ref_out, ref_list = _reference_encoder(x, params, c_list, k_h_en, k_w, p_h_en)
    for got, ref in zip(x_list, ref_list):
        err = float(jnp.max(jnp.abs(got - ref)))
        assert err < 1e-2, f"mismatch vs reference: max abs err {err}"

    print("KERNEL_OK")
</pallas_src>

<mosaic_0001>
module attributes {stable_mosaic.version = 11 : i64} {
  func.func @kernel(%arg0: memref<2x16x16xf32, #tpu.memory_space<vmem>>, %arg1: memref<3x16x32xf32, #tpu.memory_space<vmem>>, %arg2: memref<3x32xf32, #tpu.memory_space<vmem>>, %arg3: memref<3x32x32xf32, #tpu.memory_space<vmem>>, %arg4: memref<3x32xf32, #tpu.memory_space<vmem>>, %arg5: memref<3x32x32xf32, #tpu.memory_space<vmem>>, %arg6: memref<3x32xf32, #tpu.memory_space<vmem>>, %arg7: memref<2x16x32xf32, #tpu.memory_space<vmem>>, %arg8: memref<2x16x32xf32, #tpu.memory_space<vmem>>, %arg9: memref<2x16x32xf32, #tpu.memory_space<vmem>>, %arg10: memref<2x18x16xf32, #tpu.memory_space<vmem>>, %arg11: memref<2x18x32xf32, #tpu.memory_space<vmem>>, %arg12: memref<2x18x32xf32, #tpu.memory_space<vmem>>) attributes {dimension_semantics = [], scalar_prefetch = 0 : i64, scratch_operands = 3 : i64, tpu.core_type = #tpu.core_type<tc>} {
    %cst = arith.constant 0.000000e+00 : f32
    %0 = vector.broadcast %cst : f32 to vector<2x18x16xf32>
    %c0 = arith.constant 0 : index
    %c0_0 = arith.constant 0 : index
    %c0_1 = arith.constant 0 : index
    %1 = vector.load %arg10[%c0, %c0_0, %c0_1] : memref<2x18x16xf32, #tpu.memory_space<vmem>>, vector<2x18x16xf32>
    tpu.vector_store %arg10[%c0, %c0_0, %c0_1], %0 {strides = array<i32>} : memref<2x18x16xf32, #tpu.memory_space<vmem>>, vector<2x18x16xf32>,
    %cst_2 = arith.constant 0.000000e+00 : f32
    %2 = vector.broadcast %cst_2 : f32 to vector<2x18x32xf32>
    %c0_3 = arith.constant 0 : index
    %c0_4 = arith.constant 0 : index
    %c0_5 = arith.constant 0 : index
    %3 = vector.load %arg11[%c0_3, %c0_4, %c0_5] : memref<2x18x32xf32, #tpu.memory_space<vmem>>, vector<2x18x32xf32>
    tpu.vector_store %arg11[%c0_3, %c0_4, %c0_5], %2 {strides = array<i32>} : memref<2x18x32xf32, #tpu.memory_space<vmem>>, vector<2x18x32xf32>,
    %cst_6 = arith.constant 0.000000e+00 : f32
    %4 = vector.broadcast %cst_6 : f32 to vector<2x18x32xf32>
    %c0_7 = arith.constant 0 : index
    %c0_8 = arith.constant 0 : index
    %c0_9 = arith.constant 0 : index
    %5 = vector.load %arg12[%c0_7, %c0_8, %c0_9] : memref<2x18x32xf32, #tpu.memory_space<vmem>>, vector<2x18x32xf32>
    tpu.vector_store %arg12[%c0_7, %c0_8, %c0_9], %4 {strides = array<i32>} : memref<2x18x32xf32, #tpu.memory_space<vmem>>, vector<2x18x32xf32>,
    %c0_10 = arith.constant 0 : index
    %c0_11 = arith.constant 0 : index
    %c0_12 = arith.constant 0 : index
    %6 = vector.load %arg0[%c0_10, %c0_11, %c0_12] : memref<2x16x16xf32, #tpu.memory_space<vmem>>, vector<2x16x16xf32>
    %c0_13 = arith.constant 0 : index
    %c1 = arith.constant 1 : index
    %c0_14 = arith.constant 0 : index
    %7 = vector.load %arg10[%c0_13, %c1, %c0_14] : memref<2x18x16xf32, #tpu.memory_space<vmem>>, vector<2x16x16xf32>
    tpu.vector_store %arg10[%c0_13, %c1, %c0_14], %6 {strides = array<i32>} : memref<2x18x16xf32, #tpu.memory_space<vmem>>, vector<2x16x16xf32>,
    %cst_15 = arith.constant 0.000000e+00 : f32
    %8 = vector.broadcast %cst_15 : f32 to vector<16x32xf32>
    %c0_16 = arith.constant 0 : index
    %c0_17 = arith.constant 0 : index
    %c0_18 = arith.constant 0 : index
    %9 = vector.load %arg10[%c0_16, %c0_17, %c0_18] : memref<2x18x16xf32, #tpu.memory_space<vmem>>, vector<1x16x16xf32>
    %10 = vector.shape_cast %9 : vector<1x16x16xf32> to vector<16x16xf32>
    %c0_19 = arith.constant 0 : index
    %c0_20 = arith.constant 0 : index
    %c0_21 = arith.constant 0 : index
    %11 = vector.load %arg1[%c0_19, %c0_20, %c0_21] : memref<3x16x32xf32, #tpu.memory_space<vmem>>, vector<1x16x32xf32>
    %12 = vector.shape_cast %11 : vector<1x16x32xf32> to vector<16x32xf32>
    %cst_22 = arith.constant dense<0.000000e+00> : vector<16x32xf32>
    %13 = tpu.matmul %10, %12, %cst_22 {dimension_numbers = #tpu.dot_dimension_numbers<[1], [0], [0], [1], [0, 0, 1, 1], [], []>} : vector<16x16xf32>, vector<16x32xf32>, vector<16x32xf32> -> vector<16x32xf32>
    %14 = arith.addf %8, %13 : vector<16x32xf32>
    %c0_23 = arith.constant 0 : index
    %c1_24 = arith.constant 1 : index
    %c0_25 = arith.constant 0 : index
    %15 = vector.load %arg10[%c0_23, %c1_24, %c0_25] : memref<2x18x16xf32, #tpu.memory_space<vmem>>, vector<1x16x16xf32>
    %16 = vector.shape_cast %15 : vector<1x16x16xf32> to vector<16x16xf32>
    %c1_26 = arith.constant 1 : index
    %c0_27 = arith.constant 0 : index
    %c0_28 = arith.constant 0 : index
    %17 = vector.load %arg1[%c1_26, %c0_27, %c0_28] : memref<3x16x32xf32, #tpu.memory_space<vmem>>, vector<1x16x32xf32>
    %18 = vector.shape_cast %17 : vector<1x16x32xf32> to vector<16x32xf32>
    %cst_29 = arith.constant dense<0.000000e+00> : vector<16x32xf32>
    %19 = tpu.matmul %16, %18, %cst_29 {dimension_numbers = #tpu.dot_dimension_numbers<[1], [0], [0], [1], [0, 0, 1, 1], [], []>} : vector<16x16xf32>, vector<16x32xf32>, vector<16x32xf32> -> vector<16x32xf32>
    %20 = arith.addf %14, %19 : vector<16x32xf32>
    %c0_30 = arith.constant 0 : index
    %c2 = arith.constant 2 : index
    %c0_31 = arith.constant 0 : index
    %21 = vector.load %arg10[%c0_30, %c2, %c0_31] : memref<2x18x16xf32, #tpu.memory_space<vmem>>, vector<1x16x16xf32>
    %22 = vector.shape_cast %21 : vector<1x16x16xf32> to vector<16x16xf32>
    %c2_32 = arith.constant 2 : index
    %c0_33 = arith.constant 0 : index
    %c0_34 = arith.constant 0 : index
    %23 = vector.load %arg1[%c2_32, %c0_33, %c0_34] : memref<3x16x32xf32, #tpu.memory_space<vmem>>, vector<1x16x32xf32>
    %24 = vector.shape_cast %23 : vector<1x16x32xf32> to vector<16x32xf32>
    %cst_35 = arith.constant dense<0.000000e+00> : vector<16x32xf32>
    %25 = tpu.matmul %22, %24, %cst_35 {dimension_numbers = #tpu.dot_dimension_numbers<[1], [0], [0], [1], [0, 0, 1, 1], [], []>} : vector<16x16xf32>, vector<16x32xf32>, vector<16x32xf32> -> vector<16x32xf32>
    %26 = arith.addf %20, %25 : vector<16x32xf32>
    %c0_36 = arith.constant 0 : index
    %c0_37 = arith.constant 0 : index
    %27 = vector.load %arg2[%c0_36, %c0_37] : memref<3x32xf32, #tpu.memory_space<vmem>>, vector<1x32xf32>
    %28 = vector.broadcast %27 : vector<1x32xf32> to vector<16x32xf32>
    %29 = arith.mulf %26, %28 : vector<16x32xf32>
    %c1_38 = arith.constant 1 : index
    %c0_39 = arith.constant 0 : index
    %30 = vector.load %arg2[%c1_38, %c0_39] : memref<3x32xf32, #tpu.memory_space<vmem>>, vector<1x32xf32>
    %31 = vector.broadcast %30 : vector<1x32xf32> to vector<16x32xf32>
    %32 = arith.addf %29, %31 : vector<16x32xf32>
    %cst_40 = arith.constant 0.000000e+00 : f32
    %33 = vector.broadcast %cst_40 : f32 to vector<16x32xf32>
    %34 = arith.cmpf ogt, %32, %33 : vector<16x32xf32>
    %c2_41 = arith.constant 2 : index
    %c0_42 = arith.constant 0 : index
    %35 = vector.load %arg2[%c2_41, %c0_42] : memref<3x32xf32, #tpu.memory_space<vmem>>, vector<1x32xf32>
    %36 = vector.broadcast %35 : vector<1x32xf32> to vector<16x32xf32>
    %37 = arith.mulf %36, %32 : vector<16x32xf32>
    %38 = arith.select %34, %32, %37 : vector<16x32xi1>, vector<16x32xf32>
    %c0_43 = arith.constant 0 : index
    %c0_44 = arith.constant 0 : index
    %c0_45 = arith.constant 0 : index
    %39 = vector.load %arg7[%c0_43, %c0_44, %c0_45] : memref<2x16x32xf32, #tpu.memory_space<vmem>>, vector<1x16x32xf32>
    %40 = vector.shape_cast %39 : vector<1x16x32xf32> to vector<16x32xf32>
    %41 = vector.shape_cast %38 : vector<16x32xf32> to vector<1x16x32xf32>
    tpu.vector_store %arg7[%c0_43, %c0_44, %c0_45], %41 {strides = array<i32>} : memref<2x16x32xf32, #tpu.memory_space<vmem>>, vector<1x16x32xf32>,
    %c0_46 = arith.constant 0 : index
    %c1_47 = arith.constant 1 : index
    %c0_48 = arith.constant 0 : index
    %42 = vector.load %arg11[%c0_46, %c1_47, %c0_48] : memref<2x18x32xf32, #tpu.memory_space<vmem>>, vector<1x16x32xf32>
    %43 = vector.shape_cast %42 : vector<1x16x32xf32> to vector<16x32xf32>
    %44 = vector.shape_cast %38 : vector<16x32xf32> to vector<1x16x32xf32>
    tpu.vector_store %arg11[%c0_46, %c1_47, %c0_48], %44 {strides = array<i32>} : memref<2x18x32xf32, #tpu.memory_space<vmem>>, vector<1x16x32xf32>,
    %cst_49 = arith.constant 0.000000e+00 : f32
    %45 = vector.broadcast %cst_49 : f32 to vector<16x32xf32>
    %c1_50 = arith.constant 1 : index
    %c0_51 = arith.constant 0 : index
    %c0_52 = arith.constant 0 : index
    %46 = vector.load %arg10[%c1_50, %c0_51, %c0_52] : memref<2x18x16xf32, #tpu.memory_space<vmem>>, vector<1x16x16xf32>
    %47 = vector.shape_cast %46 : vector<1x16x16xf32> to vector<16x16xf32>
    %c0_53 = arith.constant 0 : index
    %c0_54 = arith.constant 0 : index
    %c0_55 = arith.constant 0 : index
    %48 = vector.load %arg1[%c0_53, %c0_54, %c0_55] : memref<3x16x32xf32, #tpu.memory_space<vmem>>, vector<1x16x32xf32>
    %49 = vector.shape_cast %48 : vector<1x16x32xf32> to vector<16x32xf32>
    %cst_56 = arith.constant dense<0.000000e+00> : vector<16x32xf32>
    %50 = tpu.matmul %47, %49, %cst_56 {dimension_numbers = #tpu.dot_dimension_numbers<[1], [0], [0], [1], [0, 0, 1, 1], [], []>} : vector<16x16xf32>, vector<16x32xf32>, vector<16x32xf32> -> vector<16x32xf32>
    %51 = arith.addf %45, %50 : vector<16x32xf32>
    %c1_57 = arith.constant 1 : index
    %c1_58 = arith.constant 1 : index
    %c0_59 = arith.constant 0 : index
    %52 = vector.load %arg10[%c1_57, %c1_58, %c0_59] : memref<2x18x16xf32, #tpu.memory_space<vmem>>, vector<1x16x16xf32>
    %53 = vector.shape_cast %52 : vector<1x16x16xf32> to vector<16x16xf32>
    %c1_60 = arith.constant 1 : index
    %c0_61 = arith.constant 0 : index
    %c0_62 = arith.constant 0 : index
    %54 = vector.load %arg1[%c1_60, %c0_61, %c0_62] : memref<3x16x32xf32, #tpu.memory_space<vmem>>, vector<1x16x32xf32>
    %55 = vector.shape_cast %54 : vector<1x16x32xf32> to vector<16x32xf32>
    %cst_63 = arith.constant dense<0.000000e+00> : vector<16x32xf32>
    %56 = tpu.matmul %53, %55, %cst_63 {dimension_numbers = #tpu.dot_dimension_numbers<[1], [0], [0], [1], [0, 0, 1, 1], [], []>} : vector<16x16xf32>, vector<16x32xf32>, vector<16x32xf32> -> vector<16x32xf32>
    %57 = arith.addf %51, %56 : vector<16x32xf32>
    %c1_64 = arith.constant 1 : index
    %c2_65 = arith.constant 2 : index
    %c0_66 = arith.constant 0 : index
    %58 = vector.load %arg10[%c1_64, %c2_65, %c0_66] : memref<2x18x16xf32, #tpu.memory_space<vmem>>, vector<1x16x16xf32>
    %59 = vector.shape_cast %58 : vector<1x16x16xf32> to vector<16x16xf32>
    %c2_67 = arith.constant 2 : index
    %c0_68 = arith.constant 0 : index
    %c0_69 = arith.constant 0 : index
    %60 = vector.load %arg1[%c2_67, %c0_68, %c0_69] : memref<3x16x32xf32, #tpu.memory_space<vmem>>, vector<1x16x32xf32>
    %61 = vector.shape_cast %60 : vector<1x16x32xf32> to vector<16x32xf32>
    %cst_70 = arith.constant dense<0.000000e+00> : vector<16x32xf32>
    %62 = tpu.matmul %59, %61, %cst_70 {dimension_numbers = #tpu.dot_dimension_numbers<[1], [0], [0], [1], [0, 0, 1, 1], [], []>} : vector<16x16xf32>, vector<16x32xf32>, vector<16x32xf32> -> vector<16x32xf32>
    %63 = arith.addf %57, %62 : vector<16x32xf32>
    %c0_71 = arith.constant 0 : index
    %c0_72 = arith.constant 0 : index
    %64 = vector.load %arg2[%c0_71, %c0_72] : memref<3x32xf32, #tpu.memory_space<vmem>>, vector<1x32xf32>
    %65 = vector.broadcast %64 : vector<1x32xf32> to vector<16x32xf32>
    %66 = arith.mulf %63, %65 : vector<16x32xf32>
    %c1_73 = arith.constant 1 : index
    %c0_74 = arith.constant 0 : index
    %67 = vector.load %arg2[%c1_73, %c0_74] : memref<3x32xf32, #tpu.memory_space<vmem>>, vector<1x32xf32>
    %68 = vector.broadcast %67 : vector<1x32xf32> to vector<16x32xf32>
    %69 = arith.addf %66, %68 : vector<16x32xf32>
    %cst_75 = arith.constant 0.000000e+00 : f32
    %70 = vector.broadcast %cst_75 : f32 to vector<16x32xf32>
    %71 = arith.cmpf ogt, %69, %70 : vector<16x32xf32>
    %c2_76 = arith.constant 2 : index
    %c0_77 = arith.constant 0 : index
    %72 = vector.load %arg2[%c2_76, %c0_77] : memref<3x32xf32, #tpu.memory_space<vmem>>, vector<1x32xf32>
    %73 = vector.broadcast %72 : vector<1x32xf32> to vector<16x32xf32>
    %74 = arith.mulf %73, %69 : vector<16x32xf32>
    %75 = arith.select %71, %69, %74 : vector<16x32xi1>, vector<16x32xf32>
    %c1_78 = arith.constant 1 : index
    %c0_79 = arith.constant 0 : index
    %c0_80 = arith.constant 0 : index
    %76 = vector.load %arg7[%c1_78, %c0_79, %c0_80] : memref<2x16x32xf32, #tpu.memory_space<vmem>>, vector<1x16x32xf32>
    %77 = vector.shape_cast %76 : vector<1x16x32xf32> to vector<16x32xf32>
    %78 = vector.shape_cast %75 : vector<16x32xf32> to vector<1x16x32xf32>
    tpu.vector_store %arg7[%c1_78, %c0_79, %c0_80], %78 {strides = array<i32>} : memref<2x16x32xf32, #tpu.memory_space<vmem>>, vector<1x16x32xf32>,
    %c1_81 = arith.constant 1 : index
    %c1_82 = arith.constant 1 : index
    %c0_83 = arith.constant 0 : index
    %79 = vector.load %arg11[%c1_81, %c1_82, %c0_83] : memref<2x18x32xf32, #tpu.memory_space<vmem>>, vector<1x16x32xf32>
    %80 = vector.shape_cast %79 : vector<1x16x32xf32> to vector<16x32xf32>
    %81 = vector.shape_cast %75 : vector<16x32xf32> to vector<1x16x32xf32>
    tpu.vector_store %arg11[%c1_81, %c1_82, %c0_83], %81 {strides = array<i32>} : memref<2x18x32xf32, #tpu.memory_space<vmem>>, vector<1x16x32xf32>,
    %cst_84 = arith.constant 0.000000e+00 : f32
    %82 = vector.broadcast %cst_84 : f32 to vector<16x32xf32>
    %c0_85 = arith.constant 0 : index
    %c0_86 = arith.constant 0 : index
    %c0_87 = arith.constant 0 : index
    %83 = vector.load %arg11[%c0_85, %c0_86, %c0_87] : memref<2x18x32xf32, #tpu.memory_space<vmem>>, vector<1x16x32xf32>
    %84 = vector.shape_cast %83 : vector<1x16x32xf32> to vector<16x32xf32>
    %c0_88 = arith.constant 0 : index
    %c0_89 = arith.constant 0 : index
    %c0_90 = arith.constant 0 : index
    %85 = vector.load %arg3[%c0_88, %c0_89, %c0_90] : memref<3x32x32xf32, #tpu.memory_space<vmem>>, vector<1x32x32xf32>
    %86 = vector.shape_cast %85 : vector<1x32x32xf32> to vector<32x32xf32>
    %cst_91 = arith.constant dense<0.000000e+00> : vector<16x32xf32>
    %87 = tpu.matmul %84, %86, %cst_91 {dimension_numbers = #tpu.dot_dimension_numbers<[1], [0], [0], [1], [0, 0, 1, 1], [], []>} : vector<16x32xf32>, vector<32x32xf32>, vector<16x32xf32> -> vector<16x32xf32>
    %88 = arith.addf %82, %87 : vector<16x32xf32>
    %c0_92 = arith.constant 0 : index
    %c1_93 = arith.constant 1 : index
    %c0_94 = arith.constant 0 : index
    %89 = vector.load %arg11[%c0_92, %c1_93, %c0_94] : memref<2x18x32xf32, #tpu.memory_space<vmem>>, vector<1x16x32xf32>
    %90 = vector.shape_cast %89 : vector<1x16x32xf32> to vector<16x32xf32>
    %c1_95 = arith.constant 1 : index
    %c0_96 = arith.constant 0 : index
    %c0_97 = arith.constant 0 : index
    %91 = vector.load %arg3[%c1_95, %c0_96, %c0_97] : memref<3x32x32xf32, #tpu.memory_space<vmem>>, vector<1x32x32xf32>
    %92 = vector.shape_cast %91 : vector<1x32x32xf32> to vector<32x32xf32>
    %cst_98 = arith.constant dense<0.000000e+00> : vector<16x32xf32>
    %93 = tpu.matmul %90, %92, %cst_98 {dimension_numbers = #tpu.dot_dimension_numbers<[1], [0], [0], [1], [0, 0, 1, 1], [], []>} : vector<16x32xf32>, vector<32x32xf32>, vector<16x32xf32> -> vector<16x32xf32>
    %94 = arith.addf %88, %93 : vector<16x32xf32>
    %c0_99 = arith.constant 0 : index
    %c2_100 = arith.constant 2 : index
    %c0_101 = arith.constant 0 : index
    %95 = vector.load %arg11[%c0_99, %c2_100, %c0_101] : memref<2x18x32xf32, #tpu.memory_space<vmem>>, vector<1x16x32xf32>
    %96 = vector.shape_cast %95 : vector<1x16x32xf32> to vector<16x32xf32>
    %c2_102 = arith.constant 2 : index
    %c0_103 = arith.constant 0 : index
    %c0_104 = arith.constant 0 : index
    %97 = vector.load %arg3[%c2_102, %c0_103, %c0_104] : memref<3x32x32xf32, #tpu.memory_space<vmem>>, vector<1x32x32xf32>
    %98 = vector.shape_cast %97 : vector<1x32x32xf32> to vector<32x32xf32>
    %cst_105 = arith.constant dense<0.000000e+00> : vector<16x32xf32>
    %99 = tpu.matmul %96, %98, %cst_105 {dimension_numbers = #tpu.dot_dimension_numbers<[1], [0], [0], [1], [0, 0, 1, 1], [], []>} : vector<16x32xf32>, vector<32x32xf32>, vector<16x32xf32> -> vector<16x32xf32>
    %100 = arith.addf %94, %99 : vector<16x32xf32>
    %c0_106 = arith.constant 0 : index
    %c0_107 = arith.constant 0 : index
    %101 = vector.load %arg4[%c0_106, %c0_107] : memref<3x32xf32, #tpu.memory_space<vmem>>, vector<1x32xf32>
    %102 = vector.broadcast %101 : vector<1x32xf32> to vector<16x32xf32>
    %103 = arith.mulf %100, %102 : vector<16x32xf32>
    %c1_108 = arith.constant 1 : index
    %c0_109 = arith.constant 0 : index
    %104 = vector.load %arg4[%c1_108, %c0_109] : memref<3x32xf32, #tpu.memory_space<vmem>>, vector<1x32xf32>
    %105 = vector.broadcast %104 : vector<1x32xf32> to vector<16x32xf32>
    %106 = arith.addf %103, %105 : vector<16x32xf32>
    %cst_110 = arith.constant 0.000000e+00 : f32
    %107 = vector.broadcast %cst_110 : f32 to vector<16x32xf32>
    %108 = arith.cmpf ogt, %106, %107 : vector<16x32xf32>
    %c2_111 = arith.constant 2 : index
    %c0_112 = arith.constant 0 : index
    %109 = vector.load %arg4[%c2_111, %c0_112] : memref<3x32xf32, #tpu.memory_space<vmem>>, vector<1x32xf32>
    %110 = vector.broadcast %109 : vector<1x32xf32> to vector<16x32xf32>
    %111 = arith.mulf %110, %106 : vector<16x32xf32>
    %112 = arith.select %108, %106, %111 : vector<16x32xi1>, vector<16x32xf32>
    %c0_113 = arith.constant 0 : index
    %c0_114 = arith.constant 0 : index
    %c0_115 = arith.constant 0 : index
    %113 = vector.load %arg8[%c0_113, %c0_114, %c0_115] : memref<2x16x32xf32, #tpu.memory_space<vmem>>, vector<1x16x32xf32>
    %114 = vector.shape_cast %113 : vector<1x16x32xf32> to vector<16x32xf32>
    %115 = vector.shape_cast %112 : vector<16x32xf32> to vector<1x16x32xf32>
    tpu.vector_store %arg8[%c0_113, %c0_114, %c0_115], %115 {strides = array<i32>} : memref<2x16x32xf32, #tpu.memory_space<vmem>>, vector<1x16x32xf32>,
    %c0_116 = arith.constant 0 : index
    %c1_117 = arith.constant 1 : index
    %c0_118 = arith.constant 0 : index
    %116 = vector.load %arg12[%c0_116, %c1_117, %c0_118] : memref<2x18x32xf32, #tpu.memory_space<vmem>>, vector<1x16x32xf32>
    %117 = vector.shape_cast %116 : vector<1x16x32xf32> to vector<16x32xf32>
    %118 = vector.shape_cast %112 : vector<16x32xf32> to vector<1x16x32xf32>
    tpu.vector_store %arg12[%c0_116, %c1_117, %c0_118], %118 {strides = array<i32>} : memref<2x18x32xf32, #tpu.memory_space<vmem>>, vector<1x16x32xf32>,
    %cst_119 = arith.constant 0.000000e+00 : f32
    %119 = vector.broadcast %cst_119 : f32 to vector<16x32xf32>
    %c1_120 = arith.constant 1 : index
    %c0_121 = arith.constant 0 : index
    %c0_122 = arith.constant 0 : index
    %120 = vector.load %arg11[%c1_120, %c0_121, %c0_122] : memref<2x18x32xf32, #tpu.memory_space<vmem>>, vector<1x16x32xf32>
    %121 = vector.shape_cast %120 : vector<1x16x32xf32> to vector<16x32xf32>
    %c0_123 = arith.constant 0 : index
    %c0_124 = arith.constant 0 : index
    %c0_125 = arith.constant 0 : index
    %122 = vector.load %arg3[%c0_123, %c0_124, %c0_125] : memref<3x32x32xf32, #tpu.memory_space<vmem>>, vector<1x32x32xf32>
    %123 = vector.shape_cast %122 : vector<1x32x32xf32> to vector<32x32xf32>
    %cst_126 = arith.constant dense<0.000000e+00> : vector<16x32xf32>
    %124 = tpu.matmul %121, %123, %cst_126 {dimension_numbers = #tpu.dot_dimension_numbers<[1], [0], [0], [1], [0, 0, 1, 1], [], []>} : vector<16x32xf32>, vector<32x32xf32>, vector<16x32xf32> -> vector<16x32xf32>
    %125 = arith.addf %119, %124 : vector<16x32xf32>
    %c1_127 = arith.constant 1 : index
    %c1_128 = arith.constant 1 : index
    %c0_129 = arith.constant 0 : index
    %126 = vector.load %arg11[%c1_127, %c1_128, %c0_129] : memref<2x18x32xf32, #tpu.memory_space<vmem>>, vector<1x16x32xf32>
    %127 = vector.shape_cast %126 : vector<1x16x32xf32> to vector<16x32xf32>
    %c1_130 = arith.constant 1 : index
    %c0_131 = arith.constant 0 : index
    %c0_132 = arith.constant 0 : index
    %128 = vector.load %arg3[%c1_130, %c0_131, %c0_132] : memref<3x32x32xf32, #tpu.memory_space<vmem>>, vector<1x32x32xf32>
    %129 = vector.shape_cast %128 : vector<1x32x32xf32> to vector<32x32xf32>
    %cst_133 = arith.constant dense<0.000000e+00> : vector<16x32xf32>
    %130 = tpu.matmul %127, %129, %cst_133 {dimension_numbers = #tpu.dot_dimension_numbers<[1], [0], [0], [1], [0, 0, 1, 1], [], []>} : vector<16x32xf32>, vector<32x32xf32>, vector<16x32xf32> -> vector<16x32xf32>
    %131 = arith.addf %125, %130 : vector<16x32xf32>
    %c1_134 = arith.constant 1 : index
    %c2_135 = arith.constant 2 : index
    %c0_136 = arith.constant 0 : index
    %132 = vector.load %arg11[%c1_134, %c2_135, %c0_136] : memref<2x18x32xf32, #tpu.memory_space<vmem>>, vector<1x16x32xf32>
    %133 = vector.shape_cast %132 : vector<1x16x32xf32> to vector<16x32xf32>
    %c2_137 = arith.constant 2 : index
    %c0_138 = arith.constant 0 : index
    %c0_139 = arith.constant 0 : index
    %134 = vector.load %arg3[%c2_137, %c0_138, %c0_139] : memref<3x32x32xf32, #tpu.memory_space<vmem>>, vector<1x32x32xf32>
    %135 = vector.shape_cast %134 : vector<1x32x32xf32> to vector<32x32xf32>
    %cst_140 = arith.constant dense<0.000000e+00> : vector<16x32xf32>
    %136 = tpu.matmul %133, %135, %cst_140 {dimension_numbers = #tpu.dot_dimension_numbers<[1], [0], [0], [1], [0, 0, 1, 1], [], []>} : vector<16x32xf32>, vector<32x32xf32>, vector<16x32xf32> -> vector<16x32xf32>
    %137 = arith.addf %131, %136 : vector<16x32xf32>
    %c0_141 = arith.constant 0 : index
    %c0_142 = arith.constant 0 : index
    %138 = vector.load %arg4[%c0_141, %c0_142] : memref<3x32xf32, #tpu.memory_space<vmem>>, vector<1x32xf32>
    %139 = vector.broadcast %138 : vector<1x32xf32> to vector<16x32xf32>
    %140 = arith.mulf %137, %139 : vector<16x32xf32>
    %c1_143 = arith.constant 1 : index
    %c0_144 = arith.constant 0 : index
    %141 = vector.load %arg4[%c1_143, %c0_144] : memref<3x32xf32, #tpu.memory_space<vmem>>, vector<1x32xf32>
    %142 = vector.broadcast %141 : vector<1x32xf32> to vector<16x32xf32>
    %143 = arith.addf %140, %142 : vector<16x32xf32>
    %cst_145 = arith.constant 0.000000e+00 : f32
    %144 = vector.broadcast %cst_145 : f32 to vector<16x32xf32>
    %145 = arith.cmpf ogt, %143, %144 : vector<16x32xf32>
    %c2_146 = arith.constant 2 : index
    %c0_147 = arith.constant 0 : index
    %146 = vector.load %arg4[%c2_146, %c0_147] : memref<3x32xf32, #tpu.memory_space<vmem>>, vector<1x32xf32>
    %147 = vector.broadcast %146 : vector<1x32xf32> to vector<16x32xf32>
    %148 = arith.mulf %147, %143 : vector<16x32xf32>
    %149 = arith.select %145, %143, %148 : vector<16x32xi1>, vector<16x32xf32>
    %c1_148 = arith.constant 1 : index
    %c0_149 = arith.constant 0 : index
    %c0_150 = arith.constant 0 : index
    %150 = vector.load %arg8[%c1_148, %c0_149, %c0_150] : memref<2x16x32xf32, #tpu.memory_space<vmem>>, vector<1x16x32xf32>
    %151 = vector.shape_cast %150 : vector<1x16x32xf32> to vector<16x32xf32>
    %152 = vector.shape_cast %149 : vector<16x32xf32> to vector<1x16x32xf32>
    tpu.vector_store %arg8[%c1_148, %c0_149, %c0_150], %152 {strides = array<i32>} : memref<2x16x32xf32, #tpu.memory_space<vmem>>, vector<1x16x32xf32>,
    %c1_151 = arith.constant 1 : index
    %c1_152 = arith.constant 1 : index
    %c0_153 = arith.constant 0 : index
    %153 = vector.load %arg12[%c1_151, %c1_152, %c0_153] : memref<2x18x32xf32, #tpu.memory_space<vmem>>, vector<1x16x32xf32>
    %154 = vector.shape_cast %153 : vector<1x16x32xf32> to vector<16x32xf32>
    %155 = vector.shape_cast %149 : vector<16x32xf32> to vector<1x16x32xf32>
    tpu.vector_store %arg12[%c1_151, %c1_152, %c0_153], %155 {strides = array<i32>} : memref<2x18x32xf32, #tpu.memory_space<vmem>>, vector<1x16x32xf32>,
    %cst_154 = arith.constant 0.000000e+00 : f32
    %156 = vector.broadcast %cst_154 : f32 to vector<16x32xf32>
    %c0_155 = arith.constant 0 : index
    %c0_156 = arith.constant 0 : index
    %c0_157 = arith.constant 0 : index
    %157 = vector.load %arg12[%c0_155, %c0_156, %c0_157] : memref<2x18x32xf32, #tpu.memory_space<vmem>>, vector<1x16x32xf32>
    %158 = vector.shape_cast %157 : vector<1x16x32xf32> to vector<16x32xf32>
    %c0_158 = arith.constant 0 : index
    %c0_159 = arith.constant 0 : index
    %c0_160 = arith.constant 0 : index
    %159 = vector.load %arg5[%c0_158, %c0_159, %c0_160] : memref<3x32x32xf32, #tpu.memory_space<vmem>>, vector<1x32x32xf32>
    %160 = vector.shape_cast %159 : vector<1x32x32xf32> to vector<32x32xf32>
    %cst_161 = arith.constant dense<0.000000e+00> : vector<16x32xf32>
    %161 = tpu.matmul %158, %160, %cst_161 {dimension_numbers = #tpu.dot_dimension_numbers<[1], [0], [0], [1], [0, 0, 1, 1], [], []>} : vector<16x32xf32>, vector<32x32xf32>, vector<16x32xf32> -> vector<16x32xf32>
    %162 = arith.addf %156, %161 : vector<16x32xf32>
    %c0_162 = arith.constant 0 : index
    %c1_163 = arith.constant 1 : index
    %c0_164 = arith.constant 0 : index
    %163 = vector.load %arg12[%c0_162, %c1_163, %c0_164] : memref<2x18x32xf32, #tpu.memory_space<vmem>>, vector<1x16x32xf32>
    %164 = vector.shape_cast %163 : vector<1x16x32xf32> to vector<16x32xf32>
    %c1_165 = arith.constant 1 : index
    %c0_166 = arith.constant 0 : index
    %c0_167 = arith.constant 0 : index
    %165 = vector.load %arg5[%c1_165, %c0_166, %c0_167] : memref<3x32x32xf32, #tpu.memory_space<vmem>>, vector<1x32x32xf32>
    %166 = vector.shape_cast %165 : vector<1x32x32xf32> to vector<32x32xf32>
    %cst_168 = arith.constant dense<0.000000e+00> : vector<16x32xf32>
    %167 = tpu.matmul %164, %166, %cst_168 {dimension_numbers = #tpu.dot_dimension_numbers<[1], [0], [0], [1], [0, 0, 1, 1], [], []>} : vector<16x32xf32>, vector<32x32xf32>, vector<16x32xf32> -> vector<16x32xf32>
    %168 = arith.addf %162, %167 : vector<16x32xf32>
    %c0_169 = arith.constant 0 : index
    %c2_170 = arith.constant 2 : index
    %c0_171 = arith.constant 0 : index
    %169 = vector.load %arg12[%c0_169, %c2_170, %c0_171] : memref<2x18x32xf32, #tpu.memory_space<vmem>>, vector<1x16x32xf32>
    %170 = vector.shape_cast %169 : vector<1x16x32xf32> to vector<16x32xf32>
    %c2_172 = arith.constant 2 : index
    %c0_173 = arith.constant 0 : index
    %c0_174 = arith.constant 0 : index
    %171 = vector.load %arg5[%c2_172, %c0_173, %c0_174] : memref<3x32x32xf32, #tpu.memory_space<vmem>>, vector<1x32x32xf32>
    %172 = vector.shape_cast %171 : vector<1x32x32xf32> to vector<32x32xf32>
    %cst_175 = arith.constant dense<0.000000e+00> : vector<16x32xf32>
    %173 = tpu.matmul %170, %172, %cst_175 {dimension_numbers = #tpu.dot_dimension_numbers<[1], [0], [0], [1], [0, 0, 1, 1], [], []>} : vector<16x32xf32>, vector<32x32xf32>, vector<16x32xf32> -> vector<16x32xf32>
    %174 = arith.addf %168, %173 : vector<16x32xf32>
    %c0_176 = arith.constant 0 : index
    %c0_177 = arith.constant 0 : index
    %175 = vector.load %arg6[%c0_176, %c0_177] : memref<3x32xf32, #tpu.memory_space<vmem>>, vector<1x32xf32>
    %176 = vector.broadcast %175 : vector<1x32xf32> to vector<16x32xf32>
    %177 = arith.mulf %174, %176 : vector<16x32xf32>
    %c1_178 = arith.constant 1 : index
    %c0_179 = arith.constant 0 : index
    %178 = vector.load %arg6[%c1_178, %c0_179] : memref<3x32xf32, #tpu.memory_space<vmem>>, vector<1x32xf32>
    %179 = vector.broadcast %178 : vector<1x32xf32> to vector<16x32xf32>
    %180 = arith.addf %177, %179 : vector<16x32xf32>
    %cst_180 = arith.constant 0.000000e+00 : f32
    %181 = vector.broadcast %cst_180 : f32 to vector<16x32xf32>
    %182 = arith.cmpf ogt, %180, %181 : vector<16x32xf32>
    %c2_181 = arith.constant 2 : index
    %c0_182 = arith.constant 0 : index
    %183 = vector.load %arg6[%c2_181, %c0_182] : memref<3x32xf32, #tpu.memory_space<vmem>>, vector<1x32xf32>
    %184 = vector.broadcast %183 : vector<1x32xf32> to vector<16x32xf32>
    %185 = arith.mulf %184, %180 : vector<16x32xf32>
    %186 = arith.select %182, %180, %185 : vector<16x32xi1>, vector<16x32xf32>
    %c0_183 = arith.constant 0 : index
    %c0_184 = arith.constant 0 : index
    %c0_185 = arith.constant 0 : index
    %187 = vector.load %arg9[%c0_183, %c0_184, %c0_185] : memref<2x16x32xf32, #tpu.memory_space<vmem>>, vector<1x16x32xf32>
    %188 = vector.shape_cast %187 : vector<1x16x32xf32> to vector<16x32xf32>
    %189 = vector.shape_cast %186 : vector<16x32xf32> to vector<1x16x32xf32>
    tpu.vector_store %arg9[%c0_183, %c0_184, %c0_185], %189 {strides = array<i32>} : memref<2x16x32xf32, #tpu.memory_space<vmem>>, vector<1x16x32xf32>,
    %cst_186 = arith.constant 0.000000e+00 : f32
    %190 = vector.broadcast %cst_186 : f32 to vector<16x32xf32>
    %c1_187 = arith.constant 1 : index
    %c0_188 = arith.constant 0 : index
    %c0_189 = arith.constant 0 : index
    %191 = vector.load %arg12[%c1_187, %c0_188, %c0_189] : memref<2x18x32xf32, #tpu.memory_space<vmem>>, vector<1x16x32xf32>
    %192 = vector.shape_cast %191 : vector<1x16x32xf32> to vector<16x32xf32>
    %c0_190 = arith.constant 0 : index
    %c0_191 = arith.constant 0 : index
    %c0_192 = arith.constant 0 : index
    %193 = vector.load %arg5[%c0_190, %c0_191, %c0_192] : memref<3x32x32xf32, #tpu.memory_space<vmem>>, vector<1x32x32xf32>
    %194 = vector.shape_cast %193 : vector<1x32x32xf32> to vector<32x32xf32>
    %cst_193 = arith.constant dense<0.000000e+00> : vector<16x32xf32>
    %195 = tpu.matmul %192, %194, %cst_193 {dimension_numbers = #tpu.dot_dimension_numbers<[1], [0], [0], [1], [0, 0, 1, 1], [], []>} : vector<16x32xf32>, vector<32x32xf32>, vector<16x32xf32> -> vector<16x32xf32>
    %196 = arith.addf %190, %195 : vector<16x32xf32>
    %c1_194 = arith.constant 1 : index
    %c1_195 = arith.constant 1 : index
    %c0_196 = arith.constant 0 : index
    %197 = vector.load %arg12[%c1_194, %c1_195, %c0_196] : memref<2x18x32xf32, #tpu.memory_space<vmem>>, vector<1x16x32xf32>
    %198 = vector.shape_cast %197 : vector<1x16x32xf32> to vector<16x32xf32>
    %c1_197 = arith.constant 1 : index
    %c0_198 = arith.constant 0 : index
    %c0_199 = arith.constant 0 : index
    %199 = vector.load %arg5[%c1_197, %c0_198, %c0_199] : memref<3x32x32xf32, #tpu.memory_space<vmem>>, vector<1x32x32xf32>
    %200 = vector.shape_cast %199 : vector<1x32x32xf32> to vector<32x32xf32>
    %cst_200 = arith.constant dense<0.000000e+00> : vector<16x32xf32>
    %201 = tpu.matmul %198, %200, %cst_200 {dimension_numbers = #tpu.dot_dimension_numbers<[1], [0], [0], [1], [0, 0, 1, 1], [], []>} : vector<16x32xf32>, vector<32x32xf32>, vector<16x32xf32> -> vector<16x32xf32>
    %202 = arith.addf %196, %201 : vector<16x32xf32>
    %c1_201 = arith.constant 1 : index
    %c2_202 = arith.constant 2 : index
    %c0_203 = arith.constant 0 : index
    %203 = vector.load %arg12[%c1_201, %c2_202, %c0_203] : memref<2x18x32xf32, #tpu.memory_space<vmem>>, vector<1x16x32xf32>
    %204 = vector.shape_cast %203 : vector<1x16x32xf32> to vector<16x32xf32>
    %c2_204 = arith.constant 2 : index
    %c0_205 = arith.constant 0 : index
    %c0_206 = arith.constant 0 : index
    %205 = vector.load %arg5[%c2_204, %c0_205, %c0_206] : memref<3x32x32xf32, #tpu.memory_space<vmem>>, vector<1x32x32xf32>
    %206 = vector.shape_cast %205 : vector<1x32x32xf32> to vector<32x32xf32>
    %cst_207 = arith.constant dense<0.000000e+00> : vector<16x32xf32>
    %207 = tpu.matmul %204, %206, %cst_207 {dimension_numbers = #tpu.dot_dimension_numbers<[1], [0], [0], [1], [0, 0, 1, 1], [], []>} : vector<16x32xf32>, vector<32x32xf32>, vector<16x32xf32> -> vector<16x32xf32>
    %208 = arith.addf %202, %207 : vector<16x32xf32>
    %c0_208 = arith.constant 0 : index
    %c0_209 = arith.constant 0 : index
    %209 = vector.load %arg6[%c0_208, %c0_209] : memref<3x32xf32, #tpu.memory_space<vmem>>, vector<1x32xf32>
    %210 = vector.broadcast %209 : vector<1x32xf32> to vector<16x32xf32>
    %211 = arith.mulf %208, %210 : vector<16x32xf32>
    %c1_210 = arith.constant 1 : index
    %c0_211 = arith.constant 0 : index
    %212 = vector.load %arg6[%c1_210, %c0_211] : memref<3x32xf32, #tpu.memory_space<vmem>>, vector<1x32xf32>
    %213 = vector.broadcast %212 : vector<1x32xf32> to vector<16x32xf32>
    %214 = arith.addf %211, %213 : vector<16x32xf32>
    %cst_212 = arith.constant 0.000000e+00 : f32
    %215 = vector.broadcast %cst_212 : f32 to vector<16x32xf32>
    %216 = arith.cmpf ogt, %214, %215 : vector<16x32xf32>
    %c2_213 = arith.constant 2 : index
    %c0_214 = arith.constant 0 : index
    %217 = vector.load %arg6[%c2_213, %c0_214] : memref<3x32xf32, #tpu.memory_space<vmem>>, vector<1x32xf32>
    %218 = vector.broadcast %217 : vector<1x32xf32> to vector<16x32xf32>
    %219 = arith.mulf %218, %214 : vector<16x32xf32>
    %220 = arith.select %216, %214, %219 : vector<16x32xi1>, vector<16x32xf32>
    %c1_215 = arith.constant 1 : index
    %c0_216 = arith.constant 0 : index
    %c0_217 = arith.constant 0 : index
    %221 = vector.load %arg9[%c1_215, %c0_216, %c0_217] : memref<2x16x32xf32, #tpu.memory_space<vmem>>, vector<1x16x32xf32>
    %222 = vector.shape_cast %221 : vector<1x16x32xf32> to vector<16x32xf32>
    %223 = vector.shape_cast %220 : vector<16x32xf32> to vector<1x16x32xf32>
    tpu.vector_store %arg9[%c1_215, %c0_216, %c0_217], %223 {strides = array<i32>} : memref<2x16x32xf32, #tpu.memory_space<vmem>>, vector<1x16x32xf32>,
    return
  }
}

</mosaic_0001>

<llo_original>
// kernel: tile.48
$region0: #{tile.48}
  #allocation0 [shape = 's32[1]{0}', space=sflag, size = 0x4, scoped, tag = 'scoped memory for tile.48']
  %s0 = inlined_call_operand.vmem [shape: f32[4], index: 0, kind: input, shape index: {}]
  %s1 = inlined_call_operand.vmem [shape: f32[8,4], index: 1, kind: output, shape index: {}]
  // Predicated region
  $region2: #{tile.48} parent=0 // pred_check
    _
  $region3: #{tile.48} parent=0 // pred_check_branch
    %3 = sbr.rel (0) target = $region5
  $region4: #{tile.48} parent=0 // pred_region
    _
  $region5: #{tile.48} parent=0 // pred_fallthru
    _
  %v4 = vld [vmem:[%s0] ss:$0 sm:$0xff]
  %5 = vst [vmem:[%s1] sm:$0xff] %v4

// kernel: tile.57
$region0: #{tile.57}
  %s0 = inlined_call_operand.vmem [shape: f32[8,4], index: 0, kind: input, shape index: {}]
  %s1 = inlined_call_operand.vmem [shape: f32[1,32], index: 1, kind: output, shape index: {}]
  $region1: #{tile.57} parent=0
    #allocation0 [shape = 'u8[4096]{0}', space=vmem, size = 0x1000, scoped, tag = 'scoped mem for output reshape']
    %v2 = vld [vmem:[%s0] sm:$0x1]
    %vm3 = vcmask 31744
    %4 = vst.msk [vmem:[#allocation0] sm:$0x1] %vm3, %v2
    %s5 = scalar_lea.vmem %s0, 7
    %v6 = vld [vmem:[%s5] sm:$0x1]
    %7 = vrot.lane.b32.xlu0 %v6, 28
    %v8 = vpop.permute.xlu0 %7
    %vm9 = vcmask 261344
    %10 = vst.msk [vmem:[#allocation0] sm:$0x1] %vm9, %v8
    %s11 = scalar_lea.vmem %s0, 6
    %v12 = vld [vmem:[%s11] sm:$0x1]
    %13 = vrot.lane.b32.xlu0 %v12, 24
    %v14 = vpop.permute.xlu0 %13
    %vm15 = vcmask 228544
    %16 = vst.msk [vmem:[#allocation0] sm:$0x1] %vm15, %v14
    %s17 = scalar_lea.vmem %s0, 5
    %v18 = vld [vmem:[%s17] sm:$0x1]
    %19 = vrot.lane.b32.xlu0 %v18, 20
    %v20 = vpop.permute.xlu0 %19
    %vm21 = vcmask 195744
    %22 = vst.msk [vmem:[#allocation0] sm:$0x1] %vm21, %v20
    %s23 = scalar_lea.vmem %s0, 4
    %v24 = vld [vmem:[%s23] sm:$0x1]
    %25 = vrot.lane.b32.xlu0 %v24, 16
    %v26 = vpop.permute.xlu0 %25
    %vm27 = vcmask 162944
    %28 = vst.msk [vmem:[#allocation0] sm:$0x1] %vm27, %v26
    %s29 = scalar_lea.vmem %s0, 3
    %v30 = vld [vmem:[%s29] sm:$0x1]
    %31 = vrot.lane.b32.xlu0 %v30, 12
    %v32 = vpop.permute.xlu0 %31
    %vm33 = vcmask 130144
    %34 = vst.msk [vmem:[#allocation0] sm:$0x1] %vm33, %v32
    %s35 = scalar_lea.vmem %s0, 2
    %v36 = vld [vmem:[%s35] sm:$0x1]
    %37 = vrot.lane.b32.xlu0 %v36, 8
    %v38 = vpop.permute.xlu0 %37
    %vm39 = vcmask 97344
    %40 = vst.msk [vmem:[#allocation0] sm:$0x1] %vm39, %v38
    %s41 = scalar_lea.vmem %s0, 1
    %v42 = vld [vmem:[%s41] sm:$0x1]
    %43 = vrot.lane.b32.xlu0 %v42, 4
    %v44 = vpop.permute.xlu0 %43
    %vm45 = vcmask 64544
    %46 = vst.msk [vmem:[#allocation0] sm:$0x1] %vm45, %v44
    %s48 = sshllo.u32 0, 1
    %v50 = vld [vmem:[#allocation0] sm:%s48]
    %s51 = sshllo.u32 0, 1
    %52 = vst [vmem:[%s1] sm:%s51] %v50

// kernel: tile.63
$region0: #{tile.63}
  #allocation0 [shape = 's32[1]{0}', space=sflag, size = 0x4, scoped, tag = 'scoped memory for tile.63']
  %s0 = inlined_call_operand.vmem [shape: f32[8], index: 0, kind: input, shape index: {}]
  %s1 = inlined_call_operand.vmem [shape: f32[4,8], index: 1, kind: output, shape index: {}]
  // Predicated region
  $region2: #{tile.63} parent=0 // pred_check
    _
  $region3: #{tile.63} parent=0 // pred_check_branch
    %3 = sbr.rel (0) target = $region5
  $region4: #{tile.63} parent=0 // pred_region
    _
  $region5: #{tile.63} parent=0 // pred_fallthru
    _
  %v4 = vld [vmem:[%s0] ss:$0 sm:$0xff]
  %5 = vst [vmem:[%s1] sm:$0xf] %v4

// kernel: tile.72
$region0: #{tile.72}
  %s0 = inlined_call_operand.vmem [shape: f32[4,8], index: 0, kind: input, shape index: {}]
  %s1 = inlined_call_operand.vmem [shape: f32[1,32], index: 1, kind: output, shape index: {}]
  $region1: #{tile.72} parent=0
    #allocation0 [shape = 'u8[4096]{0}', space=vmem, size = 0x1000, scoped, tag = 'scoped mem for output reshape']
    #allocation1 [shape = 'u8[4096]{0}', space=vmem, size = 0x1000, scoped, tag = 'scoped mem for input reshape']
    %s3 = sshllo.u32 0, 4
    %v4 = vld [vmem:[%s0] sm:%s3]
    %5 = vst [vmem:[#allocation1] sm:%s3] %v4
    %v6 = vld [vmem:[#allocation1] sm:$0x1]
    %vm7 = vcmask 64512
    %8 = vst.msk [vmem:[#allocation0] sm:$0x1] %vm7, %v6
    %s9 = scalar_lea.vmem [#allocation1], 3
    %v10 = vld [vmem:[%s9] sm:$0x1]
    %11 = vrot.lane.b32.xlu0 %v10, 24
    %v12 = vpop.permute.xlu0 %11
    %vm13 = vcmask 261312
    %14 = vst.msk [vmem:[#allocation0] sm:$0x1] %vm13, %v12
    %s15 = scalar_lea.vmem [#allocation1], 2
    %v16 = vld [vmem:[%s15] sm:$0x1]
    %17 = vrot.lane.b32.xlu0 %v16, 16
    %v18 = vpop.permute.xlu0 %17
    %vm19 = vcmask 195712
    %20 = vst.msk [vmem:[#allocation0] sm:$0x1] %vm19, %v18
    %s21 = scalar_lea.vmem [#allocation1], 1
    %v22 = vld [vmem:[%s21] sm:$0x1]
    %23 = vrot.lane.b32.xlu0 %v22, 8
    %v24 = vpop.permute.xlu0 %23
    %vm25 = vcmask 130112
    %26 = vst.msk [vmem:[#allocation0] sm:$0x1] %vm25, %v24
    %s28 = sshllo.u32 0, 1
    %v30 = vld [vmem:[#allocation0] sm:%s28]
    %s31 = sshllo.u32 0, 1
    %32 = vst [vmem:[%s1] sm:%s31] %v30

// kernel: tile.78
$region0: #{tile.78}
  #allocation0 [shape = 's32[1]{0}', space=sflag, size = 0x4, scoped, tag = 'scoped memory for tile.78']
  %s0 = inlined_call_operand.vmem [shape: f32[16], index: 0, kind: input, shape index: {}]
  %s1 = inlined_call_operand.vmem [shape: f32[2,16], index: 1, kind: output, shape index: {}]
  // Predicated region
  $region2: #{tile.78} parent=0 // pred_check
    _
  $region3: #{tile.78} parent=0 // pred_check_branch
    %3 = sbr.rel (0) target = $region5
  $region4: #{tile.78} parent=0 // pred_region
    _
  $region5: #{tile.78} parent=0 // pred_fallthru
    _
  %v4 = vld [vmem:[%s0] ss:$0 sm:$0xff]
  %5 = vst [vmem:[%s1] sm:$0x3] %v4

// kernel: tile.87
$region0: #{tile.87}
  %s0 = inlined_call_operand.vmem [shape: f32[2,16], index: 0, kind: input, shape index: {}]
  %s1 = inlined_call_operand.vmem [shape: f32[1,32], index: 1, kind: output, shape index: {}]
  $region1: #{tile.87} parent=0
    #allocation0 [shape = 'u8[4096]{0}', space=vmem, size = 0x1000, scoped, tag = 'scoped mem for output reshape']
    #allocation1 [shape = 'u8[4096]{0}', space=vmem, size = 0x1000, scoped, tag = 'scoped mem for input reshape']
    %s3 = sshllo.u32 0, 2
    %v4 = vld [vmem:[%s0] sm:%s3]
    %5 = vst [vmem:[#allocation1] sm:%s3] %v4
    %v6 = vld [vmem:[#allocation1] sm:$0x1]
    %vm7 = vcmask 130048
    %8 = vst.msk [vmem:[#allocation0] sm:$0x1] %vm7, %v6
    %s9 = scalar_lea.vmem [#allocation1], 1
    %v10 = vld [vmem:[%s9] sm:$0x1]
    %11 = vrot.lane.b32.xlu0 %v10, 16
    %v12 = vpop.permute.xlu0 %11
    %vm13 = vcmask 261248
    %14 = vst.msk [vmem:[#allocation0] sm:$0x1] %vm13, %v12
    %s16 = sshllo.u32 0, 1
    %v18 = vld [vmem:[#allocation0] sm:%s16]
    %s19 = sshllo.u32 0, 1
    %20 = vst [vmem:[%s1] sm:%s19] %v18

// kernel: _lambda_.1
$region0: #{_lambda_.1}
  #allocation0 [shape = 'u32[]', space=smem, size = 0x4, offset = 0x4, fixed_abs, tag = 'smem constant byte address 0x4 - core index']
  #allocation1 [shape = 'u32[144,128]{1,0:T(1,128)}', space=vmem, size = 0x12000, scoped, tag = 'internal scratch']
  #allocation2 [shape = 'f32[2,18,16]{2,1,0:T(8,128)}', space=vmem, size = 0x6000, scoped, tag = 'scratch operand']
  #allocation3 [shape = 'f32[2,18,32]{2,1,0:T(8,128)}', space=vmem, size = 0x6000, scoped, tag = 'scratch operand']
  #allocation4 [shape = 'f32[2,18,32]{2,1,0:T(8,128)}', space=vmem, size = 0x6000, scoped, tag = 'scratch operand']
  %s0 = inlined_call_operand.vmem [shape: f32[2,16,16], index: 0, kind: input, shape index: {}]
  %s1 = inlined_call_operand.vmem [shape: f32[3,16,32], index: 1, kind: input, shape index: {}]
  %s2 = inlined_call_operand.vmem [shape: f32[3,32], index: 2, kind: input, shape index: {}]
  %s3 = inlined_call_operand.vmem [shape: f32[3,32,32], index: 3, kind: input, shape index: {}]
  %s4 = inlined_call_operand.vmem [shape: f32[3,32], index: 4, kind: input, shape index: {}]
  %s5 = inlined_call_operand.vmem [shape: f32[3,32,32], index: 5, kind: input, shape index: {}]
  %s6 = inlined_call_operand.vmem [shape: f32[3,32], index: 6, kind: input, shape index: {}]
  %s7 = inlined_call_operand.vmem [shape: f32[2,16,32], index: 7, kind: output, shape index: {0}]
  %s8 = inlined_call_operand.vmem [shape: f32[2,16,32], index: 8, kind: output, shape index: {1}]
  %s9 = inlined_call_operand.vmem [shape: f32[2,16,32], index: 9, kind: output, shape index: {2}]
  %10 = xla_tuple %s7, %s8, %s9
  %s11 = sld [smem:[#allocation0]]
  $region54: #{_lambda_.1} parent=0
    _
  %s13 = ssub.s32 1, %s11
  %s14 = scalar_select 0, %s13, %s11
  // Predicated region
  $region2: #{_lambda_.1} parent=0 // pred_check
    _
  $region3: #{_lambda_.1} parent=0 // pred_check_branch
    %16 = sbr.rel (0) target = $region5
  $region4: #{_lambda_.1} parent=0 // pred_region
    _
  $region5: #{_lambda_.1} parent=0 // pred_fallthru
    _
  // Predicated region
  $region6: #{_lambda_.1} parent=0 // pred_check
    _
  $region7: #{_lambda_.1} parent=0 // pred_check_branch
    %18 = sbr.rel (0) target = $region9
  $region8: #{_lambda_.1} parent=0 // pred_region
    _
  $region9: #{_lambda_.1} parent=0 // pred_fallthru
    _
  // Predicated region
  $region10: #{_lambda_.1} parent=0 // pred_check
    _
  $region11: #{_lambda_.1} parent=0 // pred_check_branch
    %20 = sbr.rel (0) target = $region13
  $region12: #{_lambda_.1} parent=0 // pred_region
    _
  $region13: #{_lambda_.1} parent=0 // pred_fallthru
    _
  // Predicated region
  $region14: #{_lambda_.1} parent=0 // pred_check
    _
  $region15: #{_lambda_.1} parent=0 // pred_check_branch
    %22 = sbr.rel (0) target = $region17
  $region16: #{_lambda_.1} parent=0 // pred_region
    _
  $region17: #{_lambda_.1} parent=0 // pred_fallthru
    _
  // Predicated region
  $region18: #{_lambda_.1} parent=0 // pred_check
    _
  $region19: #{_lambda_.1} parent=0 // pred_check_branch
    %24 = sbr.rel (0) target = $region21
  $region20: #{_lambda_.1} parent=0 // pred_region
    _
  $region21: #{_lambda_.1} parent=0 // pred_fallthru
    _
  // Predicated region
  $region22: #{_lambda_.1} parent=0 // pred_check
    _
  $region23: #{_lambda_.1} parent=0 // pred_check_branch
    %26 = sbr.rel (0) target = $region25
  $region24: #{_lambda_.1} parent=0 // pred_region
    _
  $region25: #{_lambda_.1} parent=0 // pred_fallthru
    _
  // Predicated region
  $region26: #{_lambda_.1} parent=0 // pred_check
    _
  $region27: #{_lambda_.1} parent=0 // pred_check_branch
    %28 = sbr.rel (0) target = $region29
  $region28: #{_lambda_.1} parent=0 // pred_region
    _
  $region29: #{_lambda_.1} parent=0 // pred_fallthru
    _
  %vm29 = vcmask 130048
  %30 = vst.msk [vmem:[#allocation2] sm:$0xff] %vm29, 0.0
  %31 = vst.msk [vmem:[#allocation2 + $0x8] sm:$0xff] %vm29, 0.0
  %vm32 = vcmask 123904
  %33 = vst.msk [vmem:[#allocation2 + $0x10] sm:$0x3] %vm32, 0.0
  %34 = vst.msk [vmem:[#allocation2 + $0x18] sm:$0xff] %vm29, 0.0
  %35 = vst.msk [vmem:[#allocation2 + $0x20] sm:$0xff] %vm29, 0.0
  %36 = vst.msk [vmem:[#allocation2 + $0x28] sm:$0x3] %vm32, 0.0
  %vm37 = vcmask 261120
  %38 = vst.msk [vmem:[#allocation3] sm:$0xff] %vm37, 0.0
  %39 = vst.msk [vmem:[#allocation3 + $0x8] sm:$0xff] %vm37, 0.0
  %vm40 = vcmask 254976
  %41 = vst.msk [vmem:[#allocation3 + $0x10] sm:$0x3] %vm40, 0.0
  %42 = vst.msk [vmem:[#allocation3 + $0x18] sm:$0xff] %vm37, 0.0
  %43 = vst.msk [vmem:[#allocation3 + $0x20] sm:$0xff] %vm37, 0.0
  %44 = vst.msk [vmem:[#allocation3 + $0x28] sm:$0x3] %vm40, 0.0
  %45 = vst.msk [vmem:[#allocation4] sm:$0xff] %vm37, 0.0
  %46 = vst.msk [vmem:[#allocation4 + $0x8] sm:$0xff] %vm37, 0.0
  %47 = vst.msk [vmem:[#allocation4 + $0x10] sm:$0x3] %vm40, 0.0
  %48 = vst.msk [vmem:[#allocation4 + $0x18] sm:$0xff] %vm37, 0.0
  %49 = vst.msk [vmem:[#allocation4 + $0x20] sm:$0xff] %vm37, 0.0
  %50 = vst.msk [vmem:[#allocation4 + $0x28] sm:$0x3] %vm40, 0.0
  %v51 = vld [vmem:[%s0] sm:$0xff]
  %v52 = vld [vmem:[%s0 + $0x8] sm:$0xff]
  %v53 = vld [vmem:[%s0 + $0x10] sm:$0xff]
  %v54 = vld [vmem:[%s0 + $0x18] sm:$0xff]
  %55 = vst.msk [vmem:[#allocation2 + $0x1] sm:$0xff] %vm29, %v51
  %56 = vst.msk [vmem:[#allocation2 + $0x9] sm:$0xff] %vm29, %v52
  %57 = vst.msk [vmem:[#allocation2 + $0x19] sm:$0xff] %vm29, %v53
  %58 = vst.msk [vmem:[#allocation2 + $0x21] sm:$0xff] %vm29, %v54
  %v59 = vld [vmem:[#allocation2] sm:$0xff]
  %v60 = vld [vmem:[#allocation2 + $0x8] sm:$0xff]
  %v61 = vld [vmem:[%s1] sm:$0xff]
  %v62 = vld [vmem:[%s1 + $0x8] sm:$0xff]
  %v63 = vld [vmem:[#allocation2 + $0x1] sm:$0xff]
  %v64 = vld [vmem:[#allocation2 + $0x9] sm:$0xff]
  %s65 = scalar_lea.vmem %s1, 16
  %v66 = vld [vmem:[%s65] sm:$0xff]
  %v67 = vld [vmem:[%s65 + $0x8] sm:$0xff]
  %v69 = vsel %vm29, %v63, 0
  %v72 = vsel %vm29, %v64, 0
  %74 = vmatprep.subr.mxu0 0.0
  %75 = vmatpush1.msra.mxu0 %v66
  %76 = vmatprep.subr.mxu0 0.0
  %77 = vmatpush1.msra.mxu0 %v67
  %78 = vmatprep.subr.mxu0 0.0
  %79 = vmatpush1.msra.mxu0 0.0
  %80 = vmatprep.subr.mxu0 0.0
  %81 = vmatpush1.msra.mxu0 0.0
  %82 = vmatprep.subr.mxu0 0.0
  %83 = vmatpush1.msra.mxu0 0.0
  %84 = vmatprep.subr.mxu0 0.0
  %85 = vmatpush1.msra.mxu0 0.0
  %86 = vmatprep.subr.mxu0 0.0
  %87 = vmatpush1.msra.mxu0 0.0
  %88 = vmatprep.subr.mxu0 0.0
  %89 = vmatpush1.msra.mxu0 0.0
  %90 = vmatprep.subr.mxu0 0.0
  %91 = vmatpush1.msra.mxu0 0.0
  %92 = vmatprep.subr.mxu0 0.0
  %93 = vmatpush1.msra.mxu0 0.0
  %94 = vmatprep.subr.mxu0 0.0
  %95 = vmatpush1.msra.mxu0 0.0
  %96 = vmatprep.subr.mxu0 0.0
  %97 = vmatpush1.msra.mxu0 0.0
  %98 = vmatprep.subr.mxu0 0.0
  %99 = vmatpush1.msra.mxu0 0.0
  %100 = vmatprep.subr.mxu0 0.0
  %101 = vmatpush1.msra.mxu0 0.0
  %102 = vmatprep.subr.mxu0 0.0
  %103 = vmatpush1.msra.mxu0 0.0
  %104 = vmatprep.subr.mxu0 0.0
  %105 = vmatpush1.msra.mxu0 0.0
  %106 = vmatprep.subr.mxu0 0.0
  %107 = vmatpush1.msra.mxu0 0.0
  %108 = vmatprep.subr.mxu0 0.0
  %109 = vmatpush1.msra.mxu0 0.0
  %110 = vmatprep.subr.mxu0 0.0
  %111 = vmatpush1.msra.mxu0 0.0
  %112 = vmatprep.subr.mxu0 0.0
  %113 = vmatpush1.msra.mxu0 0.0
  %114 = vmatprep.subr.mxu0 0.0
  %115 = vmatpush1.msra.mxu0 0.0
  %116 = vmatprep.subr.mxu0 0.0
  %117 = vmatpush1.msra.mxu0 0.0
  %118 = vmatprep.subr.mxu0 0.0
  %119 = vmatpush1.msra.mxu0 0.0
  %120 = vmatprep.subr.mxu0 0.0
  %121 = vmatpush1.msra.mxu0 0.0
  %122 = vmatprep.subr.mxu0 0.0
  %123 = vmatpush1.msra.mxu0 0.0
  %124 = vmatprep.subr.mxu0 0.0
  %125 = vmatpush1.msra.mxu0 0.0
  %126 = vmatprep.subr.mxu0 0.0
  %127 = vmatpush1.msra.mxu0 0.0
  %128 = vmatprep.subr.mxu0 0.0
  %129 = vmatpush1.msra.mxu0 0.0
  %130 = vmatprep.subr.mxu0 0.0
  %131 = vmatpush1.msra.mxu0 0.0
  %132 = vmatprep.subr.mxu0 0.0
  %133 = vmatpush1.msra.mxu0 0.0
  %134 = vmatprep.subr.mxu0 0.0
  %135 = vmatpush1.msra.mxu0 0.0
  %136 = vmatprep.subr.mxu0 0.0
  %137 = vmatpush1.msra.mxu0 0.0
  %138 = vmatprep.mubr.f32.mxu0 0.0
  %139 = vmatmul.mubr.f32.gmra.mrb[0].mxu0 %v69
  %v140 = vpop.f32.mrb[0].mxu0
  %v141 = vadd.f32 0.0, %v140
  %v142 = vpop.f32.mrb[0].mxu0
  %143 = vmatprep.mubr.f32.mxu0 0.0
  %144 = vmatmul.mubr.f32.gmra.mrb[0].mxu0 %v72
  %v145 = vpop.f32.mrb[0].mxu0
  %v146 = vadd.f32 0.0, %v145
  %v147 = vpop.f32.mrb[0].mxu0
  %148 = vdwg.mxu0
  %v150 = vsel %vm29, %v59, 0
  %v153 = vsel %vm29, %v60, 0
  %155 = vmatprep.subr.mxu0 0.0
  %156 = vmatpush1.msra.mxu0 %v61
  %157 = vmatprep.subr.mxu0 0.0
  %158 = vmatpush1.msra.mxu0 %v62
  %159 = vmatprep.subr.mxu0 0.0
  %160 = vmatpush1.msra.mxu0 0.0
  %161 = vmatprep.subr.mxu0 0.0
  %162 = vmatpush1.msra.mxu0 0.0
  %163 = vmatprep.subr.mxu0 0.0
  %164 = vmatpush1.msra.mxu0 0.0
  %165 = vmatprep.subr.mxu0 0.0
  %166 = vmatpush1.msra.mxu0 0.0
  %167 = vmatprep.subr.mxu0 0.0
  %168 = vmatpush1.msra.mxu0 0.0
  %169 = vmatprep.subr.mxu0 0.0
  %170 = vmatpush1.msra.mxu0 0.0
  %171 = vmatprep.subr.mxu0 0.0
  %172 = vmatpush1.msra.mxu0 0.0
  %173 = vmatprep.subr.mxu0 0.0
  %174 = vmatpush1.msra.mxu0 0.0
  %175 = vmatprep.subr.mxu0 0.0
  %176 = vmatpush1.msra.mxu0 0.0
  %177 = vmatprep.subr.mxu0 0.0
  %178 = vmatpush1.msra.mxu0 0.0
  %179 = vmatprep.subr.mxu0 0.0
  %180 = vmatpush1.msra.mxu0 0.0
  %181 = vmatprep.subr.mxu0 0.0
  %182 = vmatpush1.msra.mxu0 0.0
  %183 = vmatprep.subr.mxu0 0.0
  %184 = vmatpush1.msra.mxu0 0.0
  %185 = vmatprep.subr.mxu0 0.0
  %186 = vmatpush1.msra.mxu0 0.0
  %187 = vmatprep.subr.mxu0 0.0
  %188 = vmatpush1.msra.mxu0 0.0
  %189 = vmatprep.subr.mxu0 0.0
  %190 = vmatpush1.msra.mxu0 0.0
  %191 = vmatprep.subr.mxu0 0.0
  %192 = vmatpush1.msra.mxu0 0.0
  %193 = vmatprep.subr.mxu0 0.0
  %194 = vmatpush1.msra.mxu0 0.0
  %195 = vmatprep.subr.mxu0 0.0
  %196 = vmatpush1.msra.mxu0 0.0
  %197 = vmatprep.subr.mxu0 0.0
  %198 = vmatpush1.msra.mxu0 0.0
  %199 = vmatprep.subr.mxu0 0.0
  %200 = vmatpush1.msra.mxu0 0.0
  %201 = vmatprep.subr.mxu0 0.0
  %202 = vmatpush1.msra.mxu0 0.0
  %203 = vmatprep.subr.mxu0 0.0
  %204 = vmatpush1.msra.mxu0 0.0
  %205 = vmatprep.subr.mxu0 0.0
  %206 = vmatpush1.msra.mxu0 0.0
  %207 = vmatprep.subr.mxu0 0.0
  %208 = vmatpush1.msra.mxu0 0.0
  %209 = vmatprep.subr.mxu0 0.0
  %210 = vmatpush1.msra.mxu0 0.0
  %211 = vmatprep.subr.mxu0 0.0
  %212 = vmatpush1.msra.mxu0 0.0
  %213 = vmatprep.subr.mxu0 0.0
  %214 = vmatpush1.msra.mxu0 0.0
  %215 = vmatprep.subr.mxu0 0.0
  %216 = vmatpush1.msra.mxu0 0.0
  %217 = vmatprep.subr.mxu0 0.0
  %218 = vmatpush1.msra.mxu0 0.0
  %219 = vmatprep.mubr.f32.mxu0 0.0
  %220 = vmatmul.mubr.f32.gmra.mrb[0].mxu0 %v150
  %v221 = vpop.f32.mrb[0].mxu0
  %v222 = vadd.f32 %v141, %v221
  %v223 = vpop.f32.mrb[0].mxu0
  %224 = vmatprep.mubr.f32.mxu0 0.0
  %225 = vmatmul.mubr.f32.gmra.mrb[0].mxu0 %v153
  %v226 = vpop.f32.mrb[0].mxu0
  %v227 = vadd.f32 %v146, %v226
  %v228 = vpop.f32.mrb[0].mxu0
  %229 = vdwg.mxu0
  %v230 = vld [vmem:[#allocation2 + $0x2] sm:$0xff]
  %v231 = vld [vmem:[#allocation2 + $0xa] sm:$0xff]
  %s232 = scalar_lea.vmem %s1, 32
  %v233 = vld [vmem:[%s232] sm:$0xff]
  %v234 = vld [vmem:[%s232 + $0x8] sm:$0xff]
  %v236 = vsel %vm29, %v230, 0
  %v239 = vsel %vm29, %v231, 0
  %241 = vmatprep.subr.mxu0 0.0
  %242 = vmatpush1.msra.mxu0 %v233
  %243 = vmatprep.subr.mxu0 0.0
  %244 = vmatpush1.msra.mxu0 %v234
  %245 = vmatprep.subr.mxu0 0.0
  %246 = vmatpush1.msra.mxu0 0.0
  %247 = vmatprep.subr.mxu0 0.0
  %248 = vmatpush1.msra.mxu0 0.0
  %249 = vmatprep.subr.mxu0 0.0
  %250 = vmatpush1.msra.mxu0 0.0
  %251 = vmatprep.subr.mxu0 0.0
  %252 = vmatpush1.msra.mxu0 0.0
  %253 = vmatprep.subr.mxu0 0.0
  %254 = vmatpush1.msra.mxu0 0.0
  %255 = vmatprep.subr.mxu0 0.0
  %256 = vmatpush1.msra.mxu0 0.0
  %257 = vmatprep.subr.mxu0 0.0
  %258 = vmatpush1.msra.mxu0 0.0
  %259 = vmatprep.subr.mxu0 0.0
  %260 = vmatpush1.msra.mxu0 0.0
  %261 = vmatprep.subr.mxu0 0.0
  %262 = vmatpush1.msra.mxu0 0.0
  %263 = vmatprep.subr.mxu0 0.0
  %264 = vmatpush1.msra.mxu0 0.0
  %265 = vmatprep.subr.mxu0 0.0
  %266 = vmatpush1.msra.mxu0 0.0
  %267 = vmatprep.subr.mxu0 0.0
  %268 = vmatpush1.msra.mxu0 0.0
  %269 = vmatprep.subr.mxu0 0.0
  %270 = vmatpush1.msra.mxu0 0.0
  %271 = vmatprep.subr.mxu0 0.0
  %272 = vmatpush1.msra.mxu0 0.0
  %273 = vmatprep.subr.mxu0 0.0
  %274 = vmatpush1.msra.mxu0 0.0
  %275 = vmatprep.subr.mxu0 0.0
  %276 = vmatpush1.msra.mxu0 0.0
  %277 = vmatprep.subr.mxu0 0.0
  %278 = vmatpush1.msra.mxu0 0.0
  %279 = vmatprep.subr.mxu0 0.0
  %280 = vmatpush1.msra.mxu0 0.0
  %281 = vmatprep.subr.mxu0 0.0
  %282 = vmatpush1.msra.mxu0 0.0
  %283 = vmatprep.subr.mxu0 0.0
  %284 = vmatpush1.msra.mxu0 0.0
  %285 = vmatprep.subr.mxu0 0.0
  %286 = vmatpush1.msra.mxu0 0.0
  %287 = vmatprep.subr.mxu0 0.0
  %288 = vmatpush1.msra.mxu0 0.0
  %289 = vmatprep.subr.mxu0 0.0
  %290 = vmatpush1.msra.mxu0 0.0
  %291 = vmatprep.subr.mxu0 0.0
  %292 = vmatpush1.msra.mxu0 0.0
  %293 = vmatprep.subr.mxu0 0.0
  %294 = vmatpush1.msra.mxu0 0.0
  %295 = vmatprep.subr.mxu0 0.0
  %296 = vmatpush1.msra.mxu0 0.0
  %297 = vmatprep.subr.mxu0 0.0
  %298 = vmatpush1.msra.mxu0 0.0
  %299 = vmatprep.subr.mxu0 0.0
  %300 = vmatpush1.msra.mxu0 0.0
  %301 = vmatprep.subr.mxu0 0.0
  %302 = vmatpush1.msra.mxu0 0.0
  %303 = vmatprep.subr.mxu0 0.0
  %304 = vmatpush1.msra.mxu0 0.0
  %305 = vmatprep.mubr.f32.mxu0 0.0
  %306 = vmatmul.mubr.f32.gmra.mrb[0].mxu0 %v236
  %v307 = vpop.f32.mrb[0].mxu0
  %v308 = vadd.f32 0.0, %v307
  %v309 = vpop.f32.mrb[0].mxu0
  %310 = vmatprep.mubr.f32.mxu0 0.0
  %311 = vmatmul.mubr.f32.gmra.mrb[0].mxu0 %v239
  %v312 = vpop.f32.mrb[0].mxu0
  %v313 = vadd.f32 0.0, %v312
  %v314 = vpop.f32.mrb[0].mxu0
  %315 = vdwg.mxu0
  %v316 = vadd.f32 %v222, %v308
  %v317 = vadd.f32 %v227, %v313
  %v318 = vld [vmem:[%s2] sm:$0x1]
  %v319 = vlaneseq
  %v320 = vshrl.u32 %v319, 7
  %v321 = vsub.s32 0, %v320
  %v322 = vrot.slane %v318, %v321
  %v323 = vmul.f32 %v316, %v322
  %v324 = vmul.f32 %v317, %v322
  %v325 = vld [vmem:[%s2 + $0x1] sm:$0x1]
  %v326 = vlaneseq
  %v327 = vshrl.u32 %v326, 7
  %v328 = vsub.s32 0, %v327
  %v329 = vrot.slane %v325, %v328
  %v330 = vadd.f32 %v323, %v329
  %v331 = vadd.f32 %v324, %v329
  %vm332 = vcmp.gt.f32.partialorder %v330, 0.0
  %vm333 = vcmp.gt.f32.partialorder %v331, 0.0
  %v334 = vld [vmem:[%s2 + $0x2] sm:$0x1]
  %v335 = vlaneseq
  %v336 = vshrl.u32 %v335, 7
  %v337 = vsub.s32 0, %v336
  %v338 = vrot.slane %v334, %v337
  %v339 = vmul.f32 %v338, %v330
  %v340 = vmul.f32 %v338, %v331
  %v341 = vsel %vm332, %v330, %v339
  %v342 = vsel %vm333, %v331, %v340
  %343 = vst.msk [vmem:[%s7] sm:$0xff] %vm37, %v341
  %344 = vst.msk [vmem:[%s7 + $0x8] sm:$0xff] %vm37, %v342
  %345 = vst.msk [vmem:[#allocation3 + $0x1] sm:$0xff] %vm37, %v341
  %346 = vst.msk [vmem:[#allocation3 + $0x9] sm:$0xff] %vm37, %v342
  %s347 = scalar_lea.vmem [#allocation2], 24
  %v348 = vld [vmem:[%s347] sm:$0xff]
  %v349 = vld [vmem:[%s347 + $0x8] sm:$0xff]
  %v350 = vld [vmem:[%s1] sm:$0xff]
  %v351 = vld [vmem:[%s1 + $0x8] sm:$0xff]
  %v352 = vld [vmem:[%s347 + $0x1] sm:$0xff]
  %v353 = vld [vmem:[%s347 + $0x9] sm:$0xff]
  %v354 = vld [vmem:[%s65] sm:$0xff]
  %v355 = vld [vmem:[%s65 + $0x8] sm:$0xff]
  %v357 = vsel %vm29, %v352, 0
  %v360 = vsel %vm29, %v353, 0
  %362 = vmatprep.subr.mxu0 0.0
  %363 = vmatpush1.msra.mxu0 %v354
  %364 = vmatprep.subr.mxu0 0.0
  %365 = vmatpush1.msra.mxu0 %v355
  %366 = vmatprep.subr.mxu0 0.0
  %367 = vmatpush1.msra.mxu0 0.0
  %368 = vmatprep.subr.mxu0 0.0
  %369 = vmatpush1.msra.mxu0 0.0
  %370 = vmatprep.subr.mxu0 0.0
  %371 = vmatpush1.msra.mxu0 0.0
  %372 = vmatprep.subr.mxu0 0.0
  %373 = vmatpush1.msra.mxu0 0.0
  %374 = vmatprep.subr.mxu0 0.0
  %375 = vmatpush1.msra.mxu0 0.0
  %376 = vmatprep.subr.mxu0 0.0
  %377 = vmatpush1.msra.mxu0 0.0
  %378 = vmatprep.subr.mxu0 0.0
  %379 = vmatpush1.msra.mxu0 0.0
  %380 = vmatprep.subr.mxu0 0.0
  %381 = vmatpush1.msra.mxu0 0.0
  %382 = vmatprep.subr.mxu0 0.0
  %383 = vmatpush1.msra.mxu0 0.0
  %384 = vmatprep.subr.mxu0 0.0
  %385 = vmatpush1.msra.mxu0 0.0
  %386 = vmatprep.subr.mxu0 0.0
  %387 = vmatpush1.msra.mxu0 0.0
  %388 = vmatprep.subr.mxu0 0.0
  %389 = vmatpush1.msra.mxu0 0.0
  %390 = vmatprep.subr.mxu0 0.0
  %391 = vmatpush1.msra.mxu0 0.0
  %392 = vmatprep.subr.mxu0 0.0
  %393 = vmatpush1.msra.mxu0 0.0
  %394 = vmatprep.subr.mxu0 0.0
  %395 = vmatpush1.msra.mxu0 0.0
  %396 = vmatprep.subr.mxu0 0.0
  %397 = vmatpush1.msra.mxu0 0.0
  %398 = vmatprep.subr.mxu0 0.0
  %399 = vmatpush1.msra.mxu0 0.0
  %400 = vmatprep.subr.mxu0 0.0
  %401 = vmatpush1.msra.mxu0 0.0
  %402 = vmatprep.subr.mxu0 0.0
  %403 = vmatpush1.msra.mxu0 0.0
  %404 = vmatprep.subr.mxu0 0.0
  %405 = vmatpush1.msra.mxu0 0.0
  %406 = vmatprep.subr.mxu0 0.0
  %407 = vmatpush1.msra.mxu0 0.0
  %408 = vmatprep.subr.mxu0 0.0
  %409 = vmatpush1.msra.mxu0 0.0
  %410 = vmatprep.subr.mxu0 0.0
  %411 = vmatpush1.msra.mxu0 0.0
  %412 = vmatprep.subr.mxu0 0.0
  %413 = vmatpush1.msra.mxu0 0.0
  %414 = vmatprep.subr.mxu0 0.0
  %415 = vmatpush1.msra.mxu0 0.0
  %416 = vmatprep.subr.mxu0 0.0
  %417 = vmatpush1.msra.mxu0 0.0
  %418 = vmatprep.subr.mxu0 0.0
  %419 = vmatpush1.msra.mxu0 0.0
  %420 = vmatprep.subr.mxu0 0.0
  %421 = vmatpush1.msra.mxu0 0.0
  %422 = vmatprep.subr.mxu0 0.0
  %423 = vmatpush1.msra.mxu0 0.0
  %424 = vmatprep.subr.mxu0 0.0
  %425 = vmatpush1.msra.mxu0 0.0
  %426 = vmatprep.mubr.f32.mxu0 0.0
  %427 = vmatmul.mubr.f32.gmra.mrb[0].mxu0 %v357
  %v428 = vpop.f32.mrb[0].mxu0
  %v429 = vadd.f32 0.0, %v428
  %v430 = vpop.f32.mrb[0].mxu0
  %431 = vmatprep.mubr.f32.mxu0 0.0
  %432 = vmatmul.mubr.f32.gmra.mrb[0].mxu0 %v360
  %v433 = vpop.f32.mrb[0].mxu0
  %v434 = vadd.f32 0.0, %v433
  %v435 = vpop.f32.mrb[0].mxu0
  %436 = vdwg.mxu0
  %v438 = vsel %vm29, %v348, 0
  %v441 = vsel %vm29, %v349, 0
  %443 = vmatprep.subr.mxu0 0.0
  %444 = vmatpush1.msra.mxu0 %v350
  %445 = vmatprep.subr.mxu0 0.0
  %446 = vmatpush1.msra.mxu0 %v351
  %447 = vmatprep.subr.mxu0 0.0
  %448 = vmatpush1.msra.mxu0 0.0
  %449 = vmatprep.subr.mxu0 0.0
  %450 = vmatpush1.msra.mxu0 0.0
  %451 = vmatprep.subr.mxu0 0.0
  %452 = vmatpush1.msra.mxu0 0.0
  %453 = vmatprep.subr.mxu0 0.0
  %454 = vmatpush1.msra.mxu0 0.0
  %455 = vmatprep.subr.mxu0 0.0
  %456 = vmatpush1.msra.mxu0 0.0
  %457 = vmatprep.subr.mxu0 0.0
  %458 = vmatpush1.msra.mxu0 0.0
  %459 = vmatprep.subr.mxu0 0.0
  %460 = vmatpush1.msra.mxu0 0.0
  %461 = vmatprep.subr.mxu0 0.0
  %462 = vmatpush1.msra.mxu0 0.0
  %463 = vmatprep.subr.mxu0 0.0
  %464 = vmatpush1.msra.mxu0 0.0
  %465 = vmatprep.subr.mxu0 0.0
  %466 = vmatpush1.msra.mxu0 0.0
  %467 = vmatprep.subr.mxu0 0.0
  %468 = vmatpush1.msra.mxu0 0.0
  %469 = vmatprep.subr.mxu0 0.0
  %470 = vmatpush1.msra.mxu0 0.0
  %471 = vmatprep.subr.mxu0 0.0
  %472 = vmatpush1.msra.mxu0 0.0
  %473 = vmatprep.subr.mxu0 0.0
  %474 = vmatpush1.msra.mxu0 0.0
  %475 = vmatprep.subr.mxu0 0.0
  %476 = vmatpush1.msra.mxu0 0.0
  %477 = vmatprep.subr.mxu0 0.0
  %478 = vmatpush1.msra.mxu0 0.0
  %479 = vmatprep.subr.mxu0 0.0
  %480 = vmatpush1.msra.mxu0 0.0
  %481 = vmatprep.subr.mxu0 0.0
  %482 = vmatpush1.msra.mxu0 0.0
  %483 = vmatprep.subr.mxu0 0.0
  %484 = vmatpush1.msra.mxu0 0.0
  %485 = vmatprep.subr.mxu0 0.0
  %486 = vmatpush1.msra.mxu0 0.0
  %487 = vmatprep.subr.mxu0 0.0
  %488 = vmatpush1.msra.mxu0 0.0
  %489 = vmatprep.subr.mxu0 0.0
  %490 = vmatpush1.msra.mxu0 0.0
  %491 = vmatprep.subr.mxu0 0.0
  %492 = vmatpush1.msra.mxu0 0.0
  %493 = vmatprep.subr.mxu0 0.0
  %494 = vmatpush1.msra.mxu0 0.0
  %495 = vmatprep.subr.mxu0 0.0
  %496 = vmatpush1.msra.mxu0 0.0
  %497 = vmatprep.subr.mxu0 0.0
  %498 = vmatpush1.msra.mxu0 0.0
  %499 = vmatprep.subr.mxu0 0.0
  %500 = vmatpush1.msra.mxu0 0.0
  %501 = vmatprep.subr.mxu0 0.0
  %502 = vmatpush1.msra.mxu0 0.0
  %503 = vmatprep.subr.mxu0 0.0
  %504 = vmatpush1.msra.mxu0 0.0
  %505 = vmatprep.subr.mxu0 0.0
  %506 = vmatpush1.msra.mxu0 0.0
  %507 = vmatprep.mubr.f32.mxu0 0.0
  %508 = vmatmul.mubr.f32.gmra.mrb[0].mxu0 %v438
  %v509 = vpop.f32.mrb[0].mxu0
  %v510 = vadd.f32 %v429, %v509
  %v511 = vpop.f32.mrb[0].mxu0
  %512 = vmatprep.mubr.f32.mxu0 0.0
  %513 = vmatmul.mubr.f32.gmra.mrb[0].mxu0 %v441
  %v514 = vpop.f32.mrb[0].mxu0
  %v515 = vadd.f32 %v434, %v514
  %v516 = vpop.f32.mrb[0].mxu0
  %517 = vdwg.mxu0
  %v518 = vld [vmem:[%s347 + $0x2] sm:$0xff]
  %v519 = vld [vmem:[%s347 + $0xa] sm:$0xff]
  %v520 = vld [vmem:[%s232] sm:$0xff]
  %v521 = vld [vmem:[%s232 + $0x8] sm:$0xff]
  %v523 = vsel %vm29, %v518, 0
  %v526 = vsel %vm29, %v519, 0
  %528 = vmatprep.subr.mxu0 0.0
  %529 = vmatpush1.msra.mxu0 %v520
  %530 = vmatprep.subr.mxu0 0.0
  %531 = vmatpush1.msra.mxu0 %v521
  %532 = vmatprep.subr.mxu0 0.0
  %533 = vmatpush1.msra.mxu0 0.0
  %534 = vmatprep.subr.mxu0 0.0
  %535 = vmatpush1.msra.mxu0 0.0
  %536 = vmatprep.subr.mxu0 0.0
  %537 = vmatpush1.msra.mxu0 0.0
  %538 = vmatprep.subr.mxu0 0.0
  %539 = vmatpush1.msra.mxu0 0.0
  %540 = vmatprep.subr.mxu0 0.0
  %541 = vmatpush1.msra.mxu0 0.0
  %542 = vmatprep.subr.mxu0 0.0
  %543 = vmatpush1.msra.mxu0 0.0
  %544 = vmatprep.subr.mxu0 0.0
  %545 = vmatpush1.msra.mxu0 0.0
  %546 = vmatprep.subr.mxu0 0.0
  %547 = vmatpush1.msra.mxu0 0.0
  %548 = vmatprep.subr.mxu0 0.0
  %549 = vmatpush1.msra.mxu0 0.0
  %550 = vmatprep.subr.mxu0 0.0
  %551 = vmatpush1.msra.mxu0 0.0
  %552 = vmatprep.subr.mxu0 0.0
  %553 = vmatpush1.msra.mxu0 0.0
  %554 = vmatprep.subr.mxu0 0.0
  %555 = vmatpush1.msra.mxu0 0.0
  %556 = vmatprep.subr.mxu0 0.0
  %557 = vmatpush1.msra.mxu0 0.0
  %558 = vmatprep.subr.mxu0 0.0
  %559 = vmatpush1.msra.mxu0 0.0
  %560 = vmatprep.subr.mxu0 0.0
  %561 = vmatpush1.msra.mxu0 0.0
  %562 = vmatprep.subr.mxu0 0.0
  %563 = vmatpush1.msra.mxu0 0.0
  %564 = vmatprep.subr.mxu0 0.0
  %565 = vmatpush1.msra.mxu0 0.0
  %566 = vmatprep.subr.mxu0 0.0
  %567 = vmatpush1.msra.mxu0 0.0
  %568 = vmatprep.subr.mxu0 0.0
  %569 = vmatpush1.msra.mxu0 0.0
  %570 = vmatprep.subr.mxu0 0.0
  %571 = vmatpush1.msra.mxu0 0.0
  %572 = vmatprep.subr.mxu0 0.0
  %573 = vmatpush1.msra.mxu0 0.0
  %574 = vmatprep.subr.mxu0 0.0
  %575 = vmatpush1.msra.mxu0 0.0
  %576 = vmatprep.subr.mxu0 0.0
  %577 = vmatpush1.msra.mxu0 0.0
  %578 = vmatprep.subr.mxu0 0.0
  %579 = vmatpush1.msra.mxu0 0.0
  %580 = vmatprep.subr.mxu0 0.0
  %581 = vmatpush1.msra.mxu0 0.0
  %582 = vmatprep.subr.mxu0 0.0
  %583 = vmatpush1.msra.mxu0 0.0
  %584 = vmatprep.subr.mxu0 0.0
  %585 = vmatpush1.msra.mxu0 0.0
  %586 = vmatprep.subr.mxu0 0.0
  %587 = vmatpush1.msra.mxu0 0.0
  %588 = vmatprep.subr.mxu0 0.0
  %589 = vmatpush1.msra.mxu0 0.0
  %590 = vmatprep.subr.mxu0 0.0
  %591 = vmatpush1.msra.mxu0 0.0
  %592 = vmatprep.mubr.f32.mxu0 0.0
  %593 = vmatmul.mubr.f32.gmra.mrb[0].mxu0 %v523
  %v594 = vpop.f32.mrb[0].mxu0
  %v595 = vadd.f32 0.0, %v594
  %v596 = vpop.f32.mrb[0].mxu0
  %597 = vmatprep.mubr.f32.mxu0 0.0
  %598 = vmatmul.mubr.f32.gmra.mrb[0].mxu0 %v526
  %v599 = vpop.f32.mrb[0].mxu0
  %v600 = vadd.f32 0.0, %v599
  %v601 = vpop.f32.mrb[0].mxu0
  %602 = vdwg.mxu0
  %v603 = vadd.f32 %v510, %v595
  %v604 = vadd.f32 %v515, %v600
  %v605 = vld [vmem:[%s2] sm:$0x1]
  %v606 = vlaneseq
  %v607 = vshrl.u32 %v606, 7
  %v608 = vsub.s32 0, %v607
  %v609 = vrot.slane %v605, %v608
  %v610 = vmul.f32 %v603, %v609
  %v611 = vmul.f32 %v604, %v609
  %v612 = vld [vmem:[%s2 + $0x1] sm:$0x1]
  %v613 = vlaneseq
  %v614 = vshrl.u32 %v613, 7
  %v615 = vsub.s32 0, %v614
  %v616 = vrot.slane %v612, %v615
  %v617 = vadd.f32 %v610, %v616
  %v618 = vadd.f32 %v611, %v616
  %vm619 = vcmp.gt.f32.partialorder %v617, 0.0
  %vm620 = vcmp.gt.f32.partialorder %v618, 0.0
  %v621 = vld [vmem:[%s2 + $0x2] sm:$0x1]
  %v622 = vlaneseq
  %v623 = vshrl.u32 %v622, 7
  %v624 = vsub.s32 0, %v623
  %v625 = vrot.slane %v621, %v624
  %v626 = vmul.f32 %v625, %v617
  %v627 = vmul.f32 %v625, %v618
  %v628 = vsel %vm619, %v617, %v626
  %v629 = vsel %vm620, %v618, %v627
  %s630 = scalar_lea.vmem %s7, 16
  %631 = vst.msk [vmem:[%s630] sm:$0xff] %vm37, %v628
  %632 = vst.msk [vmem:[%s630 + $0x8] sm:$0xff] %vm37, %v629
  %s633 = scalar_lea.vmem [#allocation3], 24
  %634 = vst.msk [vmem:[%s633 + $0x1] sm:$0xff] %vm37, %v628
  %635 = vst.msk [vmem:[%s633 + $0x9] sm:$0xff] %vm37, %v629
  %v636 = vld [vmem:[#allocation3] sm:$0xff]
  %v637 = vld [vmem:[#allocation3 + $0x8] sm:$0xff]
  %v638 = vld [vmem:[%s3] sm:$0xff]
  %v639 = vld [vmem:[%s3 + $0x8] sm:$0xff]
  %v640 = vld [vmem:[%s3 + $0x10] sm:$0xff]
  %v641 = vld [vmem:[%s3 + $0x18] sm:$0xff]
  %v642 = vld [vmem:[#allocation3 + $0x1] sm:$0xff]
  %v643 = vld [vmem:[#allocation3 + $0x9] sm:$0xff]
  %s644 = scalar_lea.vmem %s3, 32
  %v645 = vld [vmem:[%s644] sm:$0xff]
  %v646 = vld [vmem:[%s644 + $0x8] sm:$0xff]
  %v647 = vld [vmem:[%s644 + $0x10] sm:$0xff]
  %v648 = vld [vmem:[%s644 + $0x18] sm:$0xff]
  %v650 = vsel %vm37, %v642, 0
  %v653 = vsel %vm37, %v643, 0
  %655 = vmatprep.subr.mxu0 0.0
  %656 = vmatpush1.msra.mxu0 %v645
  %657 = vmatprep.subr.mxu0 0.0
  %658 = vmatpush1.msra.mxu0 %v646
  %659 = vmatprep.subr.mxu0 0.0
  %660 = vmatpush1.msra.mxu0 %v647
  %661 = vmatprep.subr.mxu0 0.0
  %662 = vmatpush1.msra.mxu0 %v648
  %663 = vmatprep.subr.mxu0 0.0
  %664 = vmatpush1.msra.mxu0 0.0
  %665 = vmatprep.subr.mxu0 0.0
  %666 = vmatpush1.msra.mxu0 0.0
  %667 = vmatprep.subr.mxu0 0.0
  %668 = vmatpush1.msra.mxu0 0.0
  %669 = vmatprep.subr.mxu0 0.0
  %670 = vmatpush1.msra.mxu0 0.0
  %671 = vmatprep.subr.mxu0 0.0
  %672 = vmatpush1.msra.mxu0 0.0
  %673 = vmatprep.subr.mxu0 0.0
  %674 = vmatpush1.msra.mxu0 0.0
  %675 = vmatprep.subr.mxu0 0.0
  %676 = vmatpush1.msra.mxu0 0.0
  %677 = vmatprep.subr.mxu0 0.0
  %678 = vmatpush1.msra.mxu0 0.0
  %679 = vmatprep.subr.mxu0 0.0
  %680 = vmatpush1.msra.mxu0 0.0
  %681 = vmatprep.subr.mxu0 0.0
  %682 = vmatpush1.msra.mxu0 0.0
  %683 = vmatprep.subr.mxu0 0.0
  %684 = vmatpush1.msra.mxu0 0.0
  %685 = vmatprep.subr.mxu0 0.0
  %686 = vmatpush1.msra.mxu0 0.0
  %687 = vmatprep.subr.mxu0 0.0
  %688 = vmatpush1.msra.mxu0 0.0
  %689 = vmatprep.subr.mxu0 0.0
  %690 = vmatpush1.msra.mxu0 0.0
  %691 = vmatprep.subr.mxu0 0.0
  %692 = vmatpush1.msra.mxu0 0.0
  %693 = vmatprep.subr.mxu0 0.0
  %694 = vmatpush1.msra.mxu0 0.0
  %695 = vmatprep.subr.mxu0 0.0
  %696 = vmatpush1.msra.mxu0 0.0
  %697 = vmatprep.subr.mxu0 0.0
  %698 = vmatpush1.msra.mxu0 0.0
  %699 = vmatprep.subr.mxu0 0.0
  %700 = vmatpush1.msra.mxu0 0.0
  %701 = vmatprep.subr.mxu0 0.0
  %702 = vmatpush1.msra.mxu0 0.0
  %703 = vmatprep.subr.mxu0 0.0
  %704 = vmatpush1.msra.mxu0 0.0
  %705 = vmatprep.subr.mxu0 0.0
  %706 = vmatpush1.msra.mxu0 0.0
  %707 = vmatprep.subr.mxu0 0.0
  %708 = vmatpush1.msra.mxu0 0.0
  %709 = vmatprep.subr.mxu0 0.0
  %710 = vmatpush1.msra.mxu0 0.0
  %711 = vmatprep.subr.mxu0 0.0
  %712 = vmatpush1.msra.mxu0 0.0
  %713 = vmatprep.subr.mxu0 0.0
  %714 = vmatpush1.msra.mxu0 0.0
  %715 = vmatprep.subr.mxu0 0.0
  %716 = vmatpush1.msra.mxu0 0.0
  %717 = vmatprep.subr.mxu0 0.0
  %718 = vmatpush1.msra.mxu0 0.0
  %719 = vmatprep.mubr.f32.mxu0 0.0
  %720 = vmatmul.mubr.f32.gmra.mrb[0].mxu0 %v650
  %v721 = vpop.f32.mrb[0].mxu0
  %v722 = vadd.f32 0.0, %v721
  %v723 = vpop.f32.mrb[0].mxu0
  %724 = vmatprep.mubr.f32.mxu0 0.0
  %725 = vmatmul.mubr.f32.gmra.mrb[0].mxu0 %v653
  %v726 = vpop.f32.mrb[0].mxu0
  %v727 = vadd.f32 0.0, %v726
  %v728 = vpop.f32.mrb[0].mxu0
  %729 = vdwg.mxu0
  %v731 = vsel %vm37, %v636, 0
  %v734 = vsel %vm37, %v637, 0
  %736 = vmatprep.subr.mxu0 0.0
  %737 = vmatpush1.msra.mxu0 %v638
  %738 = vmatprep.subr.mxu0 0.0
  %739 = vmatpush1.msra.mxu0 %v639
  %740 = vmatprep.subr.mxu0 0.0
  %741 = vmatpush1.msra.mxu0 %v640
  %742 = vmatprep.subr.mxu0 0.0
  %743 = vmatpush1.msra.mxu0 %v641
  %744 = vmatprep.subr.mxu0 0.0
  %745 = vmatpush1.msra.mxu0 0.0
  %746 = vmatprep.subr.mxu0 0.0
  %747 = vmatpush1.msra.mxu0 0.0
  %748 = vmatprep.subr.mxu0 0.0
  %749 = vmatpush1.msra.mxu0 0.0
  %750 = vmatprep.subr.mxu0 0.0
  %751 = vmatpush1.msra.mxu0 0.0
  %752 = vmatprep.subr.mxu0 0.0
  %753 = vmatpush1.msra.mxu0 0.0
  %754 = vmatprep.subr.mxu0 0.0
  %755 = vmatpush1.msra.mxu0 0.0
  %756 = vmatprep.subr.mxu0 0.0
  %757 = vmatpush1.msra.mxu0 0.0
  %758 = vmatprep.subr.mxu0 0.0
  %759 = vmatpush1.msra.mxu0 0.0
  %760 = vmatprep.subr.mxu0 0.0
  %761 = vmatpush1.msra.mxu0 0.0
  %762 = vmatprep.subr.mxu0 0.0
  %763 = vmatpush1.msra.mxu0 0.0
  %764 = vmatprep.subr.mxu0 0.0
  %765 = vmatpush1.msra.mxu0 0.0
  %766 = vmatprep.subr.mxu0 0.0
  %767 = vmatpush1.msra.mxu0 0.0
  %768 = vmatprep.subr.mxu0 0.0
  %769 = vmatpush1.msra.mxu0 0.0
  %770 = vmatprep.subr.mxu0 0.0
  %771 = vmatpush1.msra.mxu0 0.0
  %772 = vmatprep.subr.mxu0 0.0
  %773 = vmatpush1.msra.mxu0 0.0
  %774 = vmatprep.subr.mxu0 0.0
  %775 = vmatpush1.msra.mxu0 0.0
  %776 = vmatprep.subr.mxu0 0.0
  %777 = vmatpush1.msra.mxu0 0.0
  %778 = vmatprep.subr.mxu0 0.0
  %779 = vmatpush1.msra.mxu0 0.0
  %780 = vmatprep.subr.mxu0 0.0
  %781 = vmatpush1.msra.mxu0 0.0
  %782 = vmatprep.subr.mxu0 0.0
  %783 = vmatpush1.msra.mxu0 0.0
  %784 = vmatprep.subr.mxu0 0.0
  %785 = vmatpush1.msra.mxu0 0.0
  %786 = vmatprep.subr.mxu0 0.0
  %787 = vmatpush1.msra.mxu0 0.0
  %788 = vmatprep.subr.mxu0 0.0
  %789 = vmatpush1.msra.mxu0 0.0
  %790 = vmatprep.subr.mxu0 0.0
  %791 = vmatpush1.msra.mxu0 0.0
  %792 = vmatprep.subr.mxu0 0.0
  %793 = vmatpush1.msra.mxu0 0.0
  %794 = vmatprep.subr.mxu0 0.0
  %795 = vmatpush1.msra.mxu0 0.0
  %796 = vmatprep.subr.mxu0 0.0
  %797 = vmatpush1.msra.mxu0 0.0
  %798 = vmatprep.subr.mxu0 0.0
  %799 = vmatpush1.msra.mxu0 0.0
  %800 = vmatprep.mubr.f32.mxu0 0.0
  %801 = vmatmul.mubr.f32.gmra.mrb[0].mxu0 %v731
  %v802 = vpop.f32.mrb[0].mxu0
  %v803 = vadd.f32 %v722, %v802
  %v804 = vpop.f32.mrb[0].mxu0
  %805 = vmatprep.mubr.f32.mxu0 0.0
  %806 = vmatmul.mubr.f32.gmra.mrb[0].mxu0 %v734
  %v807 = vpop.f32.mrb[0].mxu0
  %v808 = vadd.f32 %v727, %v807
  %v809 = vpop.f32.mrb[0].mxu0
  %810 = vdwg.mxu0
  %v811 = vld [vmem:[#allocation3 + $0x2] sm:$0xff]
  %v812 = vld [vmem:[#allocation3 + $0xa] sm:$0xff]
  %s813 = scalar_lea.vmem %s3, 64
  %v814 = vld [vmem:[%s813] sm:$0xff]
  %v815 = vld [vmem:[%s813 + $0x8] sm:$0xff]
  %v816 = vld [vmem:[%s813 + $0x10] sm:$0xff]
  %v817 = vld [vmem:[%s813 + $0x18] sm:$0xff]
  %v819 = vsel %vm37, %v811, 0
  %v822 = vsel %vm37, %v812, 0
  %824 = vmatprep.subr.mxu0 0.0
  %825 = vmatpush1.msra.mxu0 %v814
  %826 = vmatprep.subr.mxu0 0.0
  %827 = vmatpush1.msra.mxu0 %v815
  %828 = vmatprep.subr.mxu0 0.0
  %829 = vmatpush1.msra.mxu0 %v816
  %830 = vmatprep.subr.mxu0 0.0
  %831 = vmatpush1.msra.mxu0 %v817
  %832 = vmatprep.subr.mxu0 0.0
  %833 = vmatpush1.msra.mxu0 0.0
  %834 = vmatprep.subr.mxu0 0.0
  %835 = vmatpush1.msra.mxu0 0.0
  %836 = vmatprep.subr.mxu0 0.0
  %837 = vmatpush1.msra.mxu0 0.0
  %838 = vmatprep.subr.mxu0 0.0
  %839 = vmatpush1.msra.mxu0 0.0
  %840 = vmatprep.subr.mxu0 0.0
  %841 = vmatpush1.msra.mxu0 0.0
  %842 = vmatprep.subr.mxu0 0.0
  %843 = vmatpush1.msra.mxu0 0.0
  %844 = vmatprep.subr.mxu0 0.0
  %845 = vmatpush1.msra.mxu0 0.0
  %846 = vmatprep.subr.mxu0 0.0
  %847 = vmatpush1.msra.mxu0 0.0
  %848 = vmatprep.subr.mxu0 0.0
  %849 = vmatpush1.msra.mxu0 0.0
  %850 = vmatprep.subr.mxu0 0.0
  %851 = vmatpush1.msra.mxu0 0.0
  %852 = vmatprep.subr.mxu0 0.0
  %853 = vmatpush1.msra.mxu0 0.0
  %854 = vmatprep.subr.mxu0 0.0
  %855 = vmatpush1.msra.mxu0 0.0
  %856 = vmatprep.subr.mxu0 0.0
  %857 = vmatpush1.msra.mxu0 0.0
  %858 = vmatprep.subr.mxu0 0.0
  %859 = vmatpush1.msra.mxu0 0.0
  %860 = vmatprep.subr.mxu0 0.0
  %861 = vmatpush1.msra.mxu0 0.0
  %862 = vmatprep.subr.mxu0 0.0
  %863 = vmatpush1.msra.mxu0 0.0
  %864 = vmatprep.subr.mxu0 0.0
  %865 = vmatpush1.msra.mxu0 0.0
  %866 = vmatprep.subr.mxu0 0.0
  %867 = vmatpush1.msra.mxu0 0.0
  %868 = vmatprep.subr.mxu0 0.0
  %869 = vmatpush1.msra.mxu0 0.0
  %870 = vmatprep.subr.mxu0 0.0
  %871 = vmatpush1.msra.mxu0 0.0
  %872 = vmatprep.subr.mxu0 0.0
  %873 = vmatpush1.msra.mxu0 0.0
  %874 = vmatprep.subr.mxu0 0.0
  %875 = vmatpush1.msra.mxu0 0.0
  %876 = vmatprep.subr.mxu0 0.0
  %877 = vmatpush1.msra.mxu0 0.0
  %878 = vmatprep.subr.mxu0 0.0
  %879 = vmatpush1.msra.mxu0 0.0
  %880 = vmatprep.subr.mxu0 0.0
  %881 = vmatpush1.msra.mxu0 0.0
  %882 = vmatprep.subr.mxu0 0.0
  %883 = vmatpush1.msra.mxu0 0.0
  %884 = vmatprep.subr.mxu0 0.0
  %885 = vmatpush1.msra.mxu0 0.0
  %886 = vmatprep.subr.mxu0 0.0
  %887 = vmatpush1.msra.mxu0 0.0
  %888 = vmatprep.mubr.f32.mxu0 0.0
  %889 = vmatmul.mubr.f32.gmra.mrb[0].mxu0 %v819
  %v890 = vpop.f32.mrb[0].mxu0
  %v891 = vadd.f32 0.0, %v890
  %v892 = vpop.f32.mrb[0].mxu0
  %893 = vmatprep.mubr.f32.mxu0 0.0
  %894 = vmatmul.mubr.f32.gmra.mrb[0].mxu0 %v822
  %v895 = vpop.f32.mrb[0].mxu0
  %v896 = vadd.f32 0.0, %v895
  %v897 = vpop.f32.mrb[0].mxu0
  %898 = vdwg.mxu0
  %v899 = vadd.f32 %v803, %v891
  %v900 = vadd.f32 %v808, %v896
  %v901 = vld [vmem:[%s4] sm:$0x1]
  %v902 = vlaneseq
  %v903 = vshrl.u32 %v902, 7
  %v904 = vsub.s32 0, %v903
  %v905 = vrot.slane %v901, %v904
  %v906 = vmul.f32 %v899, %v905
  %v907 = vmul.f32 %v900, %v905
  %v908 = vld [vmem:[%s4 + $0x1] sm:$0x1]
  %v909 = vlaneseq
  %v910 = vshrl.u32 %v909, 7
  %v911 = vsub.s32 0, %v910
  %v912 = vrot.slane %v908, %v911
  %v913 = vadd.f32 %v906, %v912
  %v914 = vadd.f32 %v907, %v912
  %vm915 = vcmp.gt.f32.partialorder %v913, 0.0
  %vm916 = vcmp.gt.f32.partialorder %v914, 0.0
  %v917 = vld [vmem:[%s4 + $0x2] sm:$0x1]
  %v918 = vlaneseq
  %v919 = vshrl.u32 %v918, 7
  %v920 = vsub.s32 0, %v919
  %v921 = vrot.slane %v917, %v920
  %v922 = vmul.f32 %v921, %v913
  %v923 = vmul.f32 %v921, %v914
  %v924 = vsel %vm915, %v913, %v922
  %v925 = vsel %vm916, %v914, %v923
  %926 = vst.msk [vmem:[%s8] sm:$0xff] %vm37, %v924
  %927 = vst.msk [vmem:[%s8 + $0x8] sm:$0xff] %vm37, %v925
  %928 = vst.msk [vmem:[#allocation4 + $0x1] sm:$0xff] %vm37, %v924
  %929 = vst.msk [vmem:[#allocation4 + $0x9] sm:$0xff] %vm37, %v925
  %v930 = vld [vmem:[%s633] sm:$0xff]
  %v931 = vld [vmem:[%s633 + $0x8] sm:$0xff]
  %v932 = vld [vmem:[%s3] sm:$0xff]
  %v933 = vld [vmem:[%s3 + $0x8] sm:$0xff]
  %v934 = vld [vmem:[%s3 + $0x10] sm:$0xff]
  %v935 = vld [vmem:[%s3 + $0x18] sm:$0xff]
  %v936 = vld [vmem:[%s633 + $0x1] sm:$0xff]
  %v937 = vld [vmem:[%s633 + $0x9] sm:$0xff]
  %v938 = vld [vmem:[%s644] sm:$0xff]
  %v939 = vld [vmem:[%s644 + $0x8] sm:$0xff]
  %v940 = vld [vmem:[%s644 + $0x10] sm:$0xff]
  %v941 = vld [vmem:[%s644 + $0x18] sm:$0xff]
  %v943 = vsel %vm37, %v936, 0
  %v946 = vsel %vm37, %v937, 0
  %948 = vmatprep.subr.mxu0 0.0
  %949 = vmatpush1.msra.mxu0 %v938
  %950 = vmatprep.subr.mxu0 0.0
  %951 = vmatpush1.msra.mxu0 %v939
  %952 = vmatprep.subr.mxu0 0.0
  %953 = vmatpush1.msra.mxu0 %v940
  %954 = vmatprep.subr.mxu0 0.0
  %955 = vmatpush1.msra.mxu0 %v941
  %956 = vmatprep.subr.mxu0 0.0
  %957 = vmatpush1.msra.mxu0 0.0
  %958 = vmatprep.subr.mxu0 0.0
  %959 = vmatpush1.msra.mxu0 0.0
  %960 = vmatprep.subr.mxu0 0.0
  %961 = vmatpush1.msra.mxu0 0.0
  %962 = vmatprep.subr.mxu0 0.0
  %963 = vmatpush1.msra.mxu0 0.0
  %964 = vmatprep.subr.mxu0 0.0
  %965 = vmatpush1.msra.mxu0 0.0
  %966 = vmatprep.subr.mxu0 0.0
  %967 = vmatpush1.msra.mxu0 0.0
  %968 = vmatprep.subr.mxu0 0.0
  %969 = vmatpush1.msra.mxu0 0.0
  %970 = vmatprep.subr.mxu0 0.0
  %971 = vmatpush1.msra.mxu0 0.0
  %972 = vmatprep.subr.mxu0 0.0
  %973 = vmatpush1.msra.mxu0 0.0
  %974 = vmatprep.subr.mxu0 0.0
  %975 = vmatpush1.msra.mxu0 0.0
  %976 = vmatprep.subr.mxu0 0.0
  %977 = vmatpush1.msra.mxu0 0.0
  %978 = vmatprep.subr.mxu0 0.0
  %979 = vmatpush1.msra.mxu0 0.0
  %980 = vmatprep.subr.mxu0 0.0
  %981 = vmatpush1.msra.mxu0 0.0
  %982 = vmatprep.subr.mxu0 0.0
  %983 = vmatpush1.msra.mxu0 0.0
  %984 = vmatprep.subr.mxu0 0.0
  %985 = vmatpush1.msra.mxu0 0.0
  %986 = vmatprep.subr.mxu0 0.0
  %987 = vmatpush1.msra.mxu0 0.0
  %988 = vmatprep.subr.mxu0 0.0
  %989 = vmatpush1.msra.mxu0 0.0
  %990 = vmatprep.subr.mxu0 0.0
  %991 = vmatpush1.msra.mxu0 0.0
  %992 = vmatprep.subr.mxu0 0.0
  %993 = vmatpush1.msra.mxu0 0.0
  %994 = vmatprep.subr.mxu0 0.0
  %995 = vmatpush1.msra.mxu0 0.0
  %996 = vmatprep.subr.mxu0 0.0
  %997 = vmatpush1.msra.mxu0 0.0
  %998 = vmatprep.subr.mxu0 0.0
  %999 = vmatpush1.msra.mxu0 0.0
  %1000 = vmatprep.subr.mxu0 0.0
  %1001 = vmatpush1.msra.mxu0 0.0
  %1002 = vmatprep.subr.mxu0 0.0
  %1003 = vmatpush1.msra.mxu0 0.0
  %1004 = vmatprep.subr.mxu0 0.0
  %1005 = vmatpush1.msra.mxu0 0.0
  %1006 = vmatprep.subr.mxu0 0.0
  %1007 = vmatpush1.msra.mxu0 0.0
  %1008 = vmatprep.subr.mxu0 0.0
  %1009 = vmatpush1.msra.mxu0 0.0
  %1010 = vmatprep.subr.mxu0 0.0
  %1011 = vmatpush1.msra.mxu0 0.0
  %1012 = vmatprep.mubr.f32.mxu0 0.0
  %1013 = vmatmul.mubr.f32.gmra.mrb[0].mxu0 %v943
  %v1014 = vpop.f32.mrb[0].mxu0
  %v1015 = vadd.f32 0.0, %v1014
  %v1016 = vpop.f32.mrb[0].mxu0
  %1017 = vmatprep.mubr.f32.mxu0 0.0
  %1018 = vmatmul.mubr.f32.gmra.mrb[0].mxu0 %v946
  %v1019 = vpop.f32.mrb[0].mxu0
  %v1020 = vadd.f32 0.0, %v1019
  %v1021 = vpop.f32.mrb[0].mxu0
  %1022 = vdwg.mxu0
  %v1024 = vsel %vm37, %v930, 0
  %v1027 = vsel %vm37, %v931, 0
  %1029 = vmatprep.subr.mxu0 0.0
  %1030 = vmatpush1.msra.mxu0 %v932
  %1031 = vmatprep.subr.mxu0 0.0
  %1032 = vmatpush1.msra.mxu0 %v933
  %1033 = vmatprep.subr.mxu0 0.0
  %1034 = vmatpush1.msra.mxu0 %v934
  %1035 = vmatprep.subr.mxu0 0.0
  %1036 = vmatpush1.msra.mxu0 %v935
  %1037 = vmatprep.subr.mxu0 0.0
  %1038 = vmatpush1.msra.mxu0 0.0
  %1039 = vmatprep.subr.mxu0 0.0
  %1040 = vmatpush1.msra.mxu0 0.0
  %1041 = vmatprep.subr.mxu0 0.0
  %1042 = vmatpush1.msra.mxu0 0.0
  %1043 = vmatprep.subr.mxu0 0.0
  %1044 = vmatpush1.msra.mxu0 0.0
  %1045 = vmatprep.subr.mxu0 0.0
  %1046 = vmatpush1.msra.mxu0 0.0
  %1047 = vmatprep.subr.mxu0 0.0
  %1048 = vmatpush1.msra.mxu0 0.0
  %1049 = vmatprep.subr.mxu0 0.0
  %1050 = vmatpush1.msra.mxu0 0.0
  %1051 = vmatprep.subr.mxu0 0.0
  %1052 = vmatpush1.msra.mxu0 0.0
  %1053 = vmatprep.subr.mxu0 0.0
  %1054 = vmatpush1.msra.mxu0 0.0
  %1055 = vmatprep.subr.mxu0 0.0
  %1056 = vmatpush1.msra.mxu0 0.0
  %1057 = vmatprep.subr.mxu0 0.0
  %1058 = vmatpush1.msra.mxu0 0.0
  %1059 = vmatprep.subr.mxu0 0.0
  %1060 = vmatpush1.msra.mxu0 0.0
  %1061 = vmatprep.subr.mxu0 0.0
  %1062 = vmatpush1.msra.mxu0 0.0
  %1063 = vmatprep.subr.mxu0 0.0
  %1064 = vmatpush1.msra.mxu0 0.0
  %1065 = vmatprep.subr.mxu0 0.0
  %1066 = vmatpush1.msra.mxu0 0.0
  %1067 = vmatprep.subr.mxu0 0.0
  %1068 = vmatpush1.msra.mxu0 0.0
  %1069 = vmatprep.subr.mxu0 0.0
  %1070 = vmatpush1.msra.mxu0 0.0
  %1071 = vmatprep.subr.mxu0 0.0
  %1072 = vmatpush1.msra.mxu0 0.0
  %1073 = vmatprep.subr.mxu0 0.0
  %1074 = vmatpush1.msra.mxu0 0.0
  %1075 = vmatprep.subr.mxu0 0.0
  %1076 = vmatpush1.msra.mxu0 0.0
  %1077 = vmatprep.subr.mxu0 0.0
  %1078 = vmatpush1.msra.mxu0 0.0
  %1079 = vmatprep.subr.mxu0 0.0
  %1080 = vmatpush1.msra.mxu0 0.0
  %1081 = vmatprep.subr.mxu0 0.0
  %1082 = vmatpush1.msra.mxu0 0.0
  %1083 = vmatprep.subr.mxu0 0.0
  %1084 = vmatpush1.msra.mxu0 0.0
  %1085 = vmatprep.subr.mxu0 0.0
  %1086 = vmatpush1.msra.mxu0 0.0
  %1087 = vmatprep.subr.mxu0 0.0
  %1088 = vmatpush1.msra.mxu0 0.0
  %1089 = vmatprep.subr.mxu0 0.0
  %1090 = vmatpush1.msra.mxu0 0.0
  %1091 = vmatprep.subr.mxu0 0.0
  %1092 = vmatpush1.msra.mxu0 0.0
  %1093 = vmatprep.mubr.f32.mxu0 0.0
  %1094 = vmatmul.mubr.f32.gmra.mrb[0].mxu0 %v1024
  %v1095 = vpop.f32.mrb[0].mxu0
  %v1096 = vadd.f32 %v1015, %v1095
  %v1097 = vpop.f32.mrb[0].mxu0
  %1098 = vmatprep.mubr.f32.mxu0 0.0
  %1099 = vmatmul.mubr.f32.gmra.mrb[0].mxu0 %v1027
  %v1100 = vpop.f32.mrb[0].mxu0
  %v1101 = vadd.f32 %v1020, %v1100
  %v1102 = vpop.f32.mrb[0].mxu0
  %1103 = vdwg.mxu0
  %v1104 = vld [vmem:[%s633 + $0x2] sm:$0xff]
  %v1105 = vld [vmem:[%s633 + $0xa] sm:$0xff]
  %v1106 = vld [vmem:[%s813] sm:$0xff]
  %v1107 = vld [vmem:[%s813 + $0x8] sm:$0xff]
  %v1108 = vld [vmem:[%s813 + $0x10] sm:$0xff]
  %v1109 = vld [vmem:[%s813 + $0x18] sm:$0xff]
  %v1111 = vsel %vm37, %v1104, 0
  %v1114 = vsel %vm37, %v1105, 0
  %1116 = vmatprep.subr.mxu0 0.0
  %1117 = vmatpush1.msra.mxu0 %v1106
  %1118 = vmatprep.subr.mxu0 0.0
  %1119 = vmatpush1.msra.mxu0 %v1107
  %1120 = vmatprep.subr.mxu0 0.0
  %1121 = vmatpush1.msra.mxu0 %v1108
  %1122 = vmatprep.subr.mxu0 0.0
  %1123 = vmatpush1.msra.mxu0 %v1109
  %1124 = vmatprep.subr.mxu0 0.0
  %1125 = vmatpush1.msra.mxu0 0.0
  %1126 = vmatprep.subr.mxu0 0.0
  %1127 = vmatpush1.msra.mxu0 0.0
  %1128 = vmatprep.subr.mxu0 0.0
  %1129 = vmatpush1.msra.mxu0 0.0
  %1130 = vmatprep.subr.mxu0 0.0
  %1131 = vmatpush1.msra.mxu0 0.0
  %1132 = vmatprep.subr.mxu0 0.0
  %1133 = vmatpush1.msra.mxu0 0.0
  %1134 = vmatprep.subr.mxu0 0.0
  %1135 = vmatpush1.msra.mxu0 0.0
  %1136 = vmatprep.subr.mxu0 0.0
  %1137 = vmatpush1.msra.mxu0 0.0
  %1138 = vmatprep.subr.mxu0 0.0
  %1139 = vmatpush1.msra.mxu0 0.0
  %1140 = vmatprep.subr.mxu0 0.0
  %1141 = vmatpush1.msra.mxu0 0.0
  %1142 = vmatprep.subr.mxu0 0.0
  %1143 = vmatpush1.msra.mxu0 0.0
  %1144 = vmatprep.subr.mxu0 0.0
  %1145 = vmatpush1.msra.mxu0 0.0
  %1146 = vmatprep.subr.mxu0 0.0
  %1147 = vmatpush1.msra.mxu0 0.0
  %1148 = vmatprep.subr.mxu0 0.0
  %1149 = vmatpush1.msra.mxu0 0.0
  %1150 = vmatprep.subr.mxu0 0.0
  %1151 = vmatpush1.msra.mxu0 0.0
  %1152 = vmatprep.subr.mxu0 0.0
  %1153 = vmatpush1.msra.mxu0 0.0
  %1154 = vmatprep.subr.mxu0 0.0
  %1155 = vmatpush1.msra.mxu0 0.0
  %1156 = vmatprep.subr.mxu0 0.0
  %1157 = vmatpush1.msra.mxu0 0.0
  %1158 = vmatprep.subr.mxu0 0.0
  %1159 = vmatpush1.msra.mxu0 0.0
  %1160 = vmatprep.subr.mxu0 0.0
  %1161 = vmatpush1.msra.mxu0 0.0
  %1162 = vmatprep.subr.mxu0 0.0
  %1163 = vmatpush1.msra.mxu0 0.0
  %1164 = vmatprep.subr.mxu0 0.0
  %1165 = vmatpush1.msra.mxu0 0.0
  %1166 = vmatprep.subr.mxu0 0.0
  %1167 = vmatpush1.msra.mxu0 0.0
  %1168 = vmatprep.subr.mxu0 0.0
  %1169 = vmatpush1.msra.mxu0 0.0
  %1170 = vmatprep.subr.mxu0 0.0
  %1171 = vmatpush1.msra.mxu0 0.0
  %1172 = vmatprep.subr.mxu0 0.0
  %1173 = vmatpush1.msra.mxu0 0.0
  %1174 = vmatprep.subr.mxu0 0.0
  %1175 = vmatpush1.msra.mxu0 0.0
  %1176 = vmatprep.subr.mxu0 0.0
  %1177 = vmatpush1.msra.mxu0 0.0
  %1178 = vmatprep.subr.mxu0 0.0
  %1179 = vmatpush1.msra.mxu0 0.0
  %1180 = vmatprep.mubr.f32.mxu0 0.0
  %1181 = vmatmul.mubr.f32.gmra.mrb[0].mxu0 %v1111
  %v1182 = vpop.f32.mrb[0].mxu0
  %v1183 = vadd.f32 0.0, %v1182
  %v1184 = vpop.f32.mrb[0].mxu0
  %1185 = vmatprep.mubr.f32.mxu0 0.0
  %1186 = vmatmul.mubr.f32.gmra.mrb[0].mxu0 %v1114
  %v1187 = vpop.f32.mrb[0].mxu0
  %v1188 = vadd.f32 0.0, %v1187
  %v1189 = vpop.f32.mrb[0].mxu0
  %1190 = vdwg.mxu0
  %v1191 = vadd.f32 %v1096, %v1183
  %v1192 = vadd.f32 %v1101, %v1188
  %v1193 = vld [vmem:[%s4] sm:$0x1]
  %v1194 = vlaneseq
  %v1195 = vshrl.u32 %v1194, 7
  %v1196 = vsub.s32 0, %v1195
  %v1197 = vrot.slane %v1193, %v1196
  %v1198 = vmul.f32 %v1191, %v1197
  %v1199 = vmul.f32 %v1192, %v1197
  %v1200 = vld [vmem:[%s4 + $0x1] sm:$0x1]
  %v1201 = vlaneseq
  %v1202 = vshrl.u32 %v1201, 7
  %v1203 = vsub.s32 0, %v1202
  %v1204 = vrot.slane %v1200, %v1203
  %v1205 = vadd.f32 %v1198, %v1204
  %v1206 = vadd.f32 %v1199, %v1204
  %vm1207 = vcmp.gt.f32.partialorder %v1205, 0.0
  %vm1208 = vcmp.gt.f32.partialorder %v1206, 0.0
  %v1209 = vld [vmem:[%s4 + $0x2] sm:$0x1]
  %v1210 = vlaneseq
  %v1211 = vshrl.u32 %v1210, 7
  %v1212 = vsub.s32 0, %v1211
  %v1213 = vrot.slane %v1209, %v1212
  %v1214 = vmul.f32 %v1213, %v1205
  %v1215 = vmul.f32 %v1213, %v1206
  %v1216 = vsel %vm1207, %v1205, %v1214
  %v1217 = vsel %vm1208, %v1206, %v1215
  %s1218 = scalar_lea.vmem %s8, 16
  %1219 = vst.msk [vmem:[%s1218] sm:$0xff] %vm37, %v1216
  %1220 = vst.msk [vmem:[%s1218 + $0x8] sm:$0xff] %vm37, %v1217
  %s1221 = scalar_lea.vmem [#allocation4], 24
  %1222 = vst.msk [vmem:[%s1221 + $0x1] sm:$0xff] %vm37, %v1216
  %1223 = vst.msk [vmem:[%s1221 + $0x9] sm:$0xff] %vm37, %v1217
  %v1224 = vld [vmem:[#allocation4] sm:$0xff]
  %v1225 = vld [vmem:[#allocation4 + $0x8] sm:$0xff]
  %v1226 = vld [vmem:[%s5] sm:$0xff]
  %v1227 = vld [vmem:[%s5 + $0x8] sm:$0xff]
  %v1228 = vld [vmem:[%s5 + $0x10] sm:$0xff]
  %v1229 = vld [vmem:[%s5 + $0x18] sm:$0xff]
  %v1230 = vld [vmem:[#allocation4 + $0x1] sm:$0xff]
  %v1231 = vld [vmem:[#allocation4 + $0x9] sm:$0xff]
  %s1232 = scalar_lea.vmem %s5, 32
  %v1233 = vld [vmem:[%s1232] sm:$0xff]
  %v1234 = vld [vmem:[%s1232 + $0x8] sm:$0xff]
  %v1235 = vld [vmem:[%s1232 + $0x10] sm:$0xff]
  %v1236 = vld [vmem:[%s1232 + $0x18] sm:$0xff]
  %v1238 = vsel %vm37, %v1230, 0
  %v1241 = vsel %vm37, %v1231, 0
  %1243 = vmatprep.subr.mxu0 0.0
  %1244 = vmatpush1.msra.mxu0 %v1233
  %1245 = vmatprep.subr.mxu0 0.0
  %1246 = vmatpush1.msra.mxu0 %v1234
  %1247 = vmatprep.subr.mxu0 0.0
  %1248 = vmatpush1.msra.mxu0 %v1235
  %1249 = vmatprep.subr.mxu0 0.0
  %1250 = vmatpush1.msra.mxu0 %v1236
  %1251 = vmatprep.subr.mxu0 0.0
  %1252 = vmatpush1.msra.mxu0 0.0
  %1253 = vmatprep.subr.mxu0 0.0
  %1254 = vmatpush1.msra.mxu0 0.0
  %1255 = vmatprep.subr.mxu0 0.0
  %1256 = vmatpush1.msra.mxu0 0.0
  %1257 = vmatprep.subr.mxu0 0.0
  %1258 = vmatpush1.msra.mxu0 0.0
  %1259 = vmatprep.subr.mxu0 0.0
  %1260 = vmatpush1.msra.mxu0 0.0
  %1261 = vmatprep.subr.mxu0 0.0
  %1262 = vmatpush1.msra.mxu0 0.0
  %1263 = vmatprep.subr.mxu0 0.0
  %1264 = vmatpush1.msra.mxu0 0.0
  %1265 = vmatprep.subr.mxu0 0.0
  %1266 = vmatpush1.msra.mxu0 0.0
  %1267 = vmatprep.subr.mxu0 0.0
  %1268 = vmatpush1.msra.mxu0 0.0
  %1269 = vmatprep.subr.mxu0 0.0
  %1270 = vmatpush1.msra.mxu0 0.0
  %1271 = vmatprep.subr.mxu0 0.0
  %1272 = vmatpush1.msra.mxu0 0.0
  %1273 = vmatprep.subr.mxu0 0.0
  %1274 = vmatpush1.msra.mxu0 0.0
  %1275 = vmatprep.subr.mxu0 0.0
  %1276 = vmatpush1.msra.mxu0 0.0
  %1277 = vmatprep.subr.mxu0 0.0
  %1278 = vmatpush1.msra.mxu0 0.0
  %1279 = vmatprep.subr.mxu0 0.0
  %1280 = vmatpush1.msra.mxu0 0.0
  %1281 = vmatprep.subr.mxu0 0.0
  %1282 = vmatpush1.msra.mxu0 0.0
  %1283 = vmatprep.subr.mxu0 0.0
  %1284 = vmatpush1.msra.mxu0 0.0
  %1285 = vmatprep.subr.mxu0 0.0
  %1286 = vmatpush1.msra.mxu0 0.0
  %1287 = vmatprep.subr.mxu0 0.0
  %1288 = vmatpush1.msra.mxu0 0.0
  %1289 = vmatprep.subr.mxu0 0.0
  %1290 = vmatpush1.msra.mxu0 0.0
  %1291 = vmatprep.subr.mxu0 0.0
  %1292 = vmatpush1.msra.mxu0 0.0
  %1293 = vmatprep.subr.mxu0 0.0
  %1294 = vmatpush1.msra.mxu0 0.0
  %1295 = vmatprep.subr.mxu0 0.0
  %1296 = vmatpush1.msra.mxu0 0.0
  %1297 = vmatprep.subr.mxu0 0.0
  %1298 = vmatpush1.msra.mxu0 0.0
  %1299 = vmatprep.subr.mxu0 0.0
  %1300 = vmatpush1.msra.mxu0 0.0
  %1301 = vmatprep.subr.mxu0 0.0
  %1302 = vmatpush1.msra.mxu0 0.0
  %1303 = vmatprep.subr.mxu0 0.0
  %1304 = vmatpush1.msra.mxu0 0.0
  %1305 = vmatprep.subr.mxu0 0.0
  %1306 = vmatpush1.msra.mxu0 0.0
  %1307 = vmatprep.mubr.f32.mxu0 0.0
  %1308 = vmatmul.mubr.f32.gmra.mrb[0].mxu0 %v1238
  %v1309 = vpop.f32.mrb[0].mxu0
  %v1310 = vadd.f32 0.0, %v1309
  %v1311 = vpop.f32.mrb[0].mxu0
  %1312 = vmatprep.mubr.f32.mxu0 0.0
  %1313 = vmatmul.mubr.f32.gmra.mrb[0].mxu0 %v1241
  %v1314 = vpop.f32.mrb[0].mxu0
  %v1315 = vadd.f32 0.0, %v1314
  %v1316 = vpop.f32.mrb[0].mxu0
  %1317 = vdwg.mxu0
  %v1319 = vsel %vm37, %v1224, 0
  %v1322 = vsel %vm37, %v1225, 0
  %1324 = vmatprep.subr.mxu0 0.0
  %1325 = vmatpush1.msra.mxu0 %v1226
  %1326 = vmatprep.subr.mxu0 0.0
  %1327 = vmatpush1.msra.mxu0 %v1227
  %1328 = vmatprep.subr.mxu0 0.0
  %1329 = vmatpush1.msra.mxu0 %v1228
  %1330 = vmatprep.subr.mxu0 0.0
  %1331 = vmatpush1.msra.mxu0 %v1229
  %1332 = vmatprep.subr.mxu0 0.0
  %1333 = vmatpush1.msra.mxu0 0.0
  %1334 = vmatprep.subr.mxu0 0.0
  %1335 = vmatpush1.msra.mxu0 0.0
  %1336 = vmatprep.subr.mxu0 0.0
  %1337 = vmatpush1.msra.mxu0 0.0
  %1338 = vmatprep.subr.mxu0 0.0
  %1339 = vmatpush1.msra.mxu0 0.0
  %1340 = vmatprep.subr.mxu0 0.0
  %1341 = vmatpush1.msra.mxu0 0.0
  %1342 = vmatprep.subr.mxu0 0.0
  %1343 = vmatpush1.msra.mxu0 0.0
  %1344 = vmatprep.subr.mxu0 0.0
  %1345 = vmatpush1.msra.mxu0 0.0
  %1346 = vmatprep.subr.mxu0 0.0
  %1347 = vmatpush1.msra.mxu0 0.0
  %1348 = vmatprep.subr.mxu0 0.0
  %1349 = vmatpush1.msra.mxu0 0.0
  %1350 = vmatprep.subr.mxu0 0.0
  %1351 = vmatpush1.msra.mxu0 0.0
  %1352 = vmatprep.subr.mxu0 0.0
  %1353 = vmatpush1.msra.mxu0 0.0
  %1354 = vmatprep.subr.mxu0 0.0
  %1355 = vmatpush1.msra.mxu0 0.0
  %1356 = vmatprep.subr.mxu0 0.0
  %1357 = vmatpush1.msra.mxu0 0.0
  %1358 = vmatprep.subr.mxu0 0.0
  %1359 = vmatpush1.msra.mxu0 0.0
  %1360 = vmatprep.subr.mxu0 0.0
  %1361 = vmatpush1.msra.mxu0 0.0
  %1362 = vmatprep.subr.mxu0 0.0
  %1363 = vmatpush1.msra.mxu0 0.0
  %1364 = vmatprep.subr.mxu0 0.0
  %1365 = vmatpush1.msra.mxu0 0.0
  %1366 = vmatprep.subr.mxu0 0.0
  %1367 = vmatpush1.msra.mxu0 0.0
  %1368 = vmatprep.subr.mxu0 0.0
  %1369 = vmatpush1.msra.mxu0 0.0
  %1370 = vmatprep.subr.mxu0 0.0
  %1371 = vmatpush1.msra.mxu0 0.0
  %1372 = vmatprep.subr.mxu0 0.0
  %1373 = vmatpush1.msra.mxu0 0.0
  %1374 = vmatprep.subr.mxu0 0.0
  %1375 = vmatpush1.msra.mxu0 0.0
  %1376 = vmatprep.subr.mxu0 0.0
  %1377 = vmatpush1.msra.mxu0 0.0
  %1378 = vmatprep.subr.mxu0 0.0
  %1379 = vmatpush1.msra.mxu0 0.0
  %1380 = vmatprep.subr.mxu0 0.0
  %1381 = vmatpush1.msra.mxu0 0.0
  %1382 = vmatprep.subr.mxu0 0.0
  %1383 = vmatpush1.msra.mxu0 0.0
  %1384 = vmatprep.subr.mxu0 0.0
  %1385 = vmatpush1.msra.mxu0 0.0
  %1386 = vmatprep.subr.mxu0 0.0
  %1387 = vmatpush1.msra.mxu0 0.0
  %1388 = vmatprep.mubr.f32.mxu0 0.0
  %1389 = vmatmul.mubr.f32.gmra.mrb[0].mxu0 %v1319
  %v1390 = vpop.f32.mrb[0].mxu0
  %v1391 = vadd.f32 %v1310, %v1390
  %v1392 = vpop.f32.mrb[0].mxu0
  %1393 = vmatprep.mubr.f32.mxu0 0.0
  %1394 = vmatmul.mubr.f32.gmra.mrb[0].mxu0 %v1322
  %v1395 = vpop.f32.mrb[0].mxu0
  %v1396 = vadd.f32 %v1315, %v1395
  %v1397 = vpop.f32.mrb[0].mxu0
  %1398 = vdwg.mxu0
  %v1399 = vld [vmem:[#allocation4 + $0x2] sm:$0xff]
  %v1400 = vld [vmem:[#allocation4 + $0xa] sm:$0xff]
  %s1401 = scalar_lea.vmem %s5, 64
  %v1402 = vld [vmem:[%s1401] sm:$0xff]
  %v1403 = vld [vmem:[%s1401 + $0x8] sm:$0xff]
  %v1404 = vld [vmem:[%s1401 + $0x10] sm:$0xff]
  %v1405 = vld [vmem:[%s1401 + $0x18] sm:$0xff]
  %v1407 = vsel %vm37, %v1399, 0
  %v1410 = vsel %vm37, %v1400, 0
  %1412 = vmatprep.subr.mxu0 0.0
  %1413 = vmatpush1.msra.mxu0 %v1402
  %1414 = vmatprep.subr.mxu0 0.0
  %1415 = vmatpush1.msra.mxu0 %v1403
  %1416 = vmatprep.subr.mxu0 0.0
  %1417 = vmatpush1.msra.mxu0 %v1404
  %1418 = vmatprep.subr.mxu0 0.0
  %1419 = vmatpush1.msra.mxu0 %v1405
  %1420 = vmatprep.subr.mxu0 0.0
  %1421 = vmatpush1.msra.mxu0 0.0
  %1422 = vmatprep.subr.mxu0 0.0
  %1423 = vmatpush1.msra.mxu0 0.0
  %1424 = vmatprep.subr.mxu0 0.0
  %1425 = vmatpush1.msra.mxu0 0.0
  %1426 = vmatprep.subr.mxu0 0.0
  %1427 = vmatpush1.msra.mxu0 0.0
  %1428 = vmatprep.subr.mxu0 0.0
  %1429 = vmatpush1.msra.mxu0 0.0
  %1430 = vmatprep.subr.mxu0 0.0
  %1431 = vmatpush1.msra.mxu0 0.0
  %1432 = vmatprep.subr.mxu0 0.0
  %1433 = vmatpush1.msra.mxu0 0.0
  %1434 = vmatprep.subr.mxu0 0.0
  %1435 = vmatpush1.msra.mxu0 0.0
  %1436 = vmatprep.subr.mxu0 0.0
  %1437 = vmatpush1.msra.mxu0 0.0
  %1438 = vmatprep.subr.mxu0 0.0
  %1439 = vmatpush1.msra.mxu0 0.0
  %1440 = vmatprep.subr.mxu0 0.0
  %1441 = vmatpush1.msra.mxu0 0.0
  %1442 = vmatprep.subr.mxu0 0.0
  %1443 = vmatpush1.msra.mxu0 0.0
  %1444 = vmatprep.subr.mxu0 0.0
  %1445 = vmatpush1.msra.mxu0 0.0
  %1446 = vmatprep.subr.mxu0 0.0
  %1447 = vmatpush1.msra.mxu0 0.0
  %1448 = vmatprep.subr.mxu0 0.0
  %1449 = vmatpush1.msra.mxu0 0.0
  %1450 = vmatprep.subr.mxu0 0.0
  %1451 = vmatpush1.msra.mxu0 0.0
  %1452 = vmatprep.subr.mxu0 0.0
  %1453 = vmatpush1.msra.mxu0 0.0
  %1454 = vmatprep.subr.mxu0 0.0
  %1455 = vmatpush1.msra.mxu0 0.0
  %1456 = vmatprep.subr.mxu0 0.0
  %1457 = vmatpush1.msra.mxu0 0.0
  %1458 = vmatprep.subr.mxu0 0.0
  %1459 = vmatpush1.msra.mxu0 0.0
  %1460 = vmatprep.subr.mxu0 0.0
  %1461 = vmatpush1.msra.mxu0 0.0
  %1462 = vmatprep.subr.mxu0 0.0
  %1463 = vmatpush1.msra.mxu0 0.0
  %1464 = vmatprep.subr.mxu0 0.0
  %1465 = vmatpush1.msra.mxu0 0.0
  %1466 = vmatprep.subr.mxu0 0.0
  %1467 = vmatpush1.msra.mxu0 0.0
  %1468 = vmatprep.subr.mxu0 0.0
  %1469 = vmatpush1.msra.mxu0 0.0
  %1470 = vmatprep.subr.mxu0 0.0
  %1471 = vmatpush1.msra.mxu0 0.0
  %1472 = vmatprep.subr.mxu0 0.0
  %1473 = vmatpush1.msra.mxu0 0.0
  %1474 = vmatprep.subr.mxu0 0.0
  %1475 = vmatpush1.msra.mxu0 0.0
  %1476 = vmatprep.mubr.f32.mxu0 0.0
  %1477 = vmatmul.mubr.f32.gmra.mrb[0].mxu0 %v1407
  %v1478 = vpop.f32.mrb[0].mxu0
  %v1479 = vadd.f32 0.0, %v1478
  %v1480 = vpop.f32.mrb[0].mxu0
  %1481 = vmatprep.mubr.f32.mxu0 0.0
  %1482 = vmatmul.mubr.f32.gmra.mrb[0].mxu0 %v1410
  %v1483 = vpop.f32.mrb[0].mxu0
  %v1484 = vadd.f32 0.0, %v1483
  %v1485 = vpop.f32.mrb[0].mxu0
  %1486 = vdwg.mxu0
  %v1487 = vadd.f32 %v1391, %v1479
  %v1488 = vadd.f32 %v1396, %v1484
  %v1489 = vld [vmem:[%s6] sm:$0x1]
  %v1490 = vlaneseq
  %v1491 = vshrl.u32 %v1490, 7
  %v1492 = vsub.s32 0, %v1491
  %v1493 = vrot.slane %v1489, %v1492
  %v1494 = vmul.f32 %v1487, %v1493
  %v1495 = vmul.f32 %v1488, %v1493
  %v1496 = vld [vmem:[%s6 + $0x1] sm:$0x1]
  %v1497 = vlaneseq
  %v1498 = vshrl.u32 %v1497, 7
  %v1499 = vsub.s32 0, %v1498
  %v1500 = vrot.slane %v1496, %v1499
  %v1501 = vadd.f32 %v1494, %v1500
  %v1502 = vadd.f32 %v1495, %v1500
  %vm1503 = vcmp.gt.f32.partialorder %v1501, 0.0
  %vm1504 = vcmp.gt.f32.partialorder %v1502, 0.0
  %v1505 = vld [vmem:[%s6 + $0x2] sm:$0x1]
  %v1506 = vlaneseq
  %v1507 = vshrl.u32 %v1506, 7
  %v1508 = vsub.s32 0, %v1507
  %v1509 = vrot.slane %v1505, %v1508
  %v1510 = vmul.f32 %v1509, %v1501
  %v1511 = vmul.f32 %v1509, %v1502
  %v1512 = vsel %vm1503, %v1501, %v1510
  %v1513 = vsel %vm1504, %v1502, %v1511
  %1514 = vst.msk [vmem:[%s9] sm:$0xff] %vm37, %v1512
  %1515 = vst.msk [vmem:[%s9 + $0x8] sm:$0xff] %vm37, %v1513
  %v1516 = vld [vmem:[%s1221] sm:$0xff]
  %v1517 = vld [vmem:[%s1221 + $0x8] sm:$0xff]
  %v1518 = vld [vmem:[%s5] sm:$0xff]
  %v1519 = vld [vmem:[%s5 + $0x8] sm:$0xff]
  %v1520 = vld [vmem:[%s5 + $0x10] sm:$0xff]
  %v1521 = vld [vmem:[%s5 + $0x18] sm:$0xff]
  %v1522 = vld [vmem:[%s1221 + $0x1] sm:$0xff]
  %v1523 = vld [vmem:[%s1221 + $0x9] sm:$0xff]
  %v1524 = vld [vmem:[%s1232] sm:$0xff]
  %v1525 = vld [vmem:[%s1232 + $0x8] sm:$0xff]
  %v1526 = vld [vmem:[%s1232 + $0x10] sm:$0xff]
  %v1527 = vld [vmem:[%s1232 + $0x18] sm:$0xff]
  %v1529 = vsel %vm37, %v1522, 0
  %v1532 = vsel %vm37, %v1523, 0
  %1534 = vmatprep.subr.mxu0 0.0
  %1535 = vmatpush1.msra.mxu0 %v1524
  %1536 = vmatprep.subr.mxu0 0.0
  %1537 = vmatpush1.msra.mxu0 %v1525
  %1538 = vmatprep.subr.mxu0 0.0
  %1539 = vmatpush1.msra.mxu0 %v1526
  %1540 = vmatprep.subr.mxu0 0.0
  %1541 = vmatpush1.msra.mxu0 %v1527
  %1542 = vmatprep.subr.mxu0 0.0
  %1543 = vmatpush1.msra.mxu0 0.0
  %1544 = vmatprep.subr.mxu0 0.0
  %1545 = vmatpush1.msra.mxu0 0.0
  %1546 = vmatprep.subr.mxu0 0.0
  %1547 = vmatpush1.msra.mxu0 0.0
  %1548 = vmatprep.subr.mxu0 0.0
  %1549 = vmatpush1.msra.mxu0 0.0
  %1550 = vmatprep.subr.mxu0 0.0
  %1551 = vmatpush1.msra.mxu0 0.0
  %1552 = vmatprep.subr.mxu0 0.0
  %1553 = vmatpush1.msra.mxu0 0.0
  %1554 = vmatprep.subr.mxu0 0.0
  %1555 = vmatpush1.msra.mxu0 0.0
  %1556 = vmatprep.subr.mxu0 0.0
  %1557 = vmatpush1.msra.mxu0 0.0
  %1558 = vmatprep.subr.mxu0 0.0
  %1559 = vmatpush1.msra.mxu0 0.0
  %1560 = vmatprep.subr.mxu0 0.0
  %1561 = vmatpush1.msra.mxu0 0.0
  %1562 = vmatprep.subr.mxu0 0.0
  %1563 = vmatpush1.msra.mxu0 0.0
  %1564 = vmatprep.subr.mxu0 0.0
  %1565 = vmatpush1.msra.mxu0 0.0
  %1566 = vmatprep.subr.mxu0 0.0
  %1567 = vmatpush1.msra.mxu0 0.0
  %1568 = vmatprep.subr.mxu0 0.0
  %1569 = vmatpush1.msra.mxu0 0.0
  %1570 = vmatprep.subr.mxu0 0.0
  %1571 = vmatpush1.msra.mxu0 0.0
  %1572 = vmatprep.subr.mxu0 0.0
  %1573 = vmatpush1.msra.mxu0 0.0
  %1574 = vmatprep.subr.mxu0 0.0
  %1575 = vmatpush1.msra.mxu0 0.0
  %1576 = vmatprep.subr.mxu0 0.0
  %1577 = vmatpush1.msra.mxu0 0.0
  %1578 = vmatprep.subr.mxu0 0.0
  %1579 = vmatpush1.msra.mxu0 0.0
  %1580 = vmatprep.subr.mxu0 0.0
  %1581 = vmatpush1.msra.mxu0 0.0
  %1582 = vmatprep.subr.mxu0 0.0
  %1583 = vmatpush1.msra.mxu0 0.0
  %1584 = vmatprep.subr.mxu0 0.0
  %1585 = vmatpush1.msra.mxu0 0.0
  %1586 = vmatprep.subr.mxu0 0.0
  %1587 = vmatpush1.msra.mxu0 0.0
  %1588 = vmatprep.subr.mxu0 0.0
  %1589 = vmatpush1.msra.mxu0 0.0
  %1590 = vmatprep.subr.mxu0 0.0
  %1591 = vmatpush1.msra.mxu0 0.0
  %1592 = vmatprep.subr.mxu0 0.0
  %1593 = vmatpush1.msra.mxu0 0.0
  %1594 = vmatprep.subr.mxu0 0.0
  %1595 = vmatpush1.msra.mxu0 0.0
  %1596 = vmatprep.subr.mxu0 0.0
  %1597 = vmatpush1.msra.mxu0 0.0
  %1598 = vmatprep.mubr.f32.mxu0 0.0
  %1599 = vmatmul.mubr.f32.gmra.mrb[0].mxu0 %v1529
  %v1600 = vpop.f32.mrb[0].mxu0
  %v1601 = vadd.f32 0.0, %v1600
  %v1602 = vpop.f32.mrb[0].mxu0
  %1603 = vmatprep.mubr.f32.mxu0 0.0
  %1604 = vmatmul.mubr.f32.gmra.mrb[0].mxu0 %v1532
  %v1605 = vpop.f32.mrb[0].mxu0
  %v1606 = vadd.f32 0.0, %v1605
  %v1607 = vpop.f32.mrb[0].mxu0
  %1608 = vdwg.mxu0
  %v1610 = vsel %vm37, %v1516, 0
  %v1613 = vsel %vm37, %v1517, 0
  %1615 = vmatprep.subr.mxu0 0.0
  %1616 = vmatpush1.msra.mxu0 %v1518
  %1617 = vmatprep.subr.mxu0 0.0
  %1618 = vmatpush1.msra.mxu0 %v1519
  %1619 = vmatprep.subr.mxu0 0.0
  %1620 = vmatpush1.msra.mxu0 %v1520
  %1621 = vmatprep.subr.mxu0 0.0
  %1622 = vmatpush1.msra.mxu0 %v1521
  %1623 = vmatprep.subr.mxu0 0.0
  %1624 = vmatpush1.msra.mxu0 0.0
  %1625 = vmatprep.subr.mxu0 0.0
  %1626 = vmatpush1.msra.mxu0 0.0
  %1627 = vmatprep.subr.mxu0 0.0
  %1628 = vmatpush1.msra.mxu0 0.0
  %1629 = vmatprep.subr.mxu0 0.0
  %1630 = vmatpush1.msra.mxu0 0.0
  %1631 = vmatprep.subr.mxu0 0.0
  %1632 = vmatpush1.msra.mxu0 0.0
  %1633 = vmatprep.subr.mxu0 0.0
  %1634 = vmatpush1.msra.mxu0 0.0
  %1635 = vmatprep.subr.mxu0 0.0
  %1636 = vmatpush1.msra.mxu0 0.0
  %1637 = vmatprep.subr.mxu0 0.0
  %1638 = vmatpush1.msra.mxu0 0.0
  %1639 = vmatprep.subr.mxu0 0.0
  %1640 = vmatpush1.msra.mxu0 0.0
  %1641 = vmatprep.subr.mxu0 0.0
  %1642 = vmatpush1.msra.mxu0 0.0
  %1643 = vmatprep.subr.mxu0 0.0
  %1644 = vmatpush1.msra.mxu0 0.0
  %1645 = vmatprep.subr.mxu0 0.0
  %1646 = vmatpush1.msra.mxu0 0.0
  %1647 = vmatprep.subr.mxu0 0.0
  %1648 = vmatpush1.msra.mxu0 0.0
  %1649 = vmatprep.subr.mxu0 0.0
  %1650 = vmatpush1.msra.mxu0 0.0
  %1651 = vmatprep.subr.mxu0 0.0
  %1652 = vmatpush1.msra.mxu0 0.0
  %1653 = vmatprep.subr.mxu0 0.0
  %1654 = vmatpush1.msra.mxu0 0.0
  %1655 = vmatprep.subr.mxu0 0.0
  %1656 = vmatpush1.msra.mxu0 0.0
  %1657 = vmatprep.subr.mxu0 0.0
  %1658 = vmatpush1.msra.mxu0 0.0
  %1659 = vmatprep.subr.mxu0 0.0
  %1660 = vmatpush1.msra.mxu0 0.0
  %1661 = vmatprep.subr.mxu0 0.0
  %1662 = vmatpush1.msra.mxu0 0.0
  %1663 = vmatprep.subr.mxu0 0.0
  %1664 = vmatpush1.msra.mxu0 0.0
  %1665 = vmatprep.subr.mxu0 0.0
  %1666 = vmatpush1.msra.mxu0 0.0
  %1667 = vmatprep.subr.mxu0 0.0
  %1668 = vmatpush1.msra.mxu0 0.0
  %1669 = vmatprep.subr.mxu0 0.0
  %1670 = vmatpush1.msra.mxu0 0.0
  %1671 = vmatprep.subr.mxu0 0.0
  %1672 = vmatpush1.msra.mxu0 0.0
  %1673 = vmatprep.subr.mxu0 0.0
  %1674 = vmatpush1.msra.mxu0 0.0
  %1675 = vmatprep.subr.mxu0 0.0
  %1676 = vmatpush1.msra.mxu0 0.0
  %1677 = vmatprep.subr.mxu0 0.0
  %1678 = vmatpush1.msra.mxu0 0.0
  %1679 = vmatprep.mubr.f32.mxu0 0.0
  %1680 = vmatmul.mubr.f32.gmra.mrb[0].mxu0 %v1610
  %v1681 = vpop.f32.mrb[0].mxu0
  %v1682 = vadd.f32 %v1601, %v1681
  %v1683 = vpop.f32.mrb[0].mxu0
  %1684 = vmatprep.mubr.f32.mxu0 0.0
  %1685 = vmatmul.mubr.f32.gmra.mrb[0].mxu0 %v1613
  %v1686 = vpop.f32.mrb[0].mxu0
  %v1687 = vadd.f32 %v1606, %v1686
  %v1688 = vpop.f32.mrb[0].mxu0
  %1689 = vdwg.mxu0
  %v1690 = vld [vmem:[%s1221 + $0x2] sm:$0xff]
  %v1691 = vld [vmem:[%s1221 + $0xa] sm:$0xff]
  %v1692 = vld [vmem:[%s1401] sm:$0xff]
  %v1693 = vld [vmem:[%s1401 + $0x8] sm:$0xff]
  %v1694 = vld [vmem:[%s1401 + $0x10] sm:$0xff]
  %v1695 = vld [vmem:[%s1401 + $0x18] sm:$0xff]
  %v1697 = vsel %vm37, %v1690, 0
  %v1700 = vsel %vm37, %v1691, 0
  %1702 = vmatprep.subr.mxu0 0.0
  %1703 = vmatpush1.msra.mxu0 %v1692
  %1704 = vmatprep.subr.mxu0 0.0
  %1705 = vmatpush1.msra.mxu0 %v1693
  %1706 = vmatprep.subr.mxu0 0.0
  %1707 = vmatpush1.msra.mxu0 %v1694
  %1708 = vmatprep.subr.mxu0 0.0
  %1709 = vmatpush1.msra.mxu0 %v1695
  %1710 = vmatprep.subr.mxu0 0.0
  %1711 = vmatpush1.msra.mxu0 0.0
  %1712 = vmatprep.subr.mxu0 0.0
  %1713 = vmatpush1.msra.mxu0 0.0
  %1714 = vmatprep.subr.mxu0 0.0
  %1715 = vmatpush1.msra.mxu0 0.0
  %1716 = vmatprep.subr.mxu0 0.0
  %1717 = vmatpush1.msra.mxu0 0.0
  %1718 = vmatprep.subr.mxu0 0.0
  %1719 = vmatpush1.msra.mxu0 0.0
  %1720 = vmatprep.subr.mxu0 0.0
  %1721 = vmatpush1.msra.mxu0 0.0
  %1722 = vmatprep.subr.mxu0 0.0
  %1723 = vmatpush1.msra.mxu0 0.0
  %1724 = vmatprep.subr.mxu0 0.0
  %1725 = vmatpush1.msra.mxu0 0.0
  %1726 = vmatprep.subr.mxu0 0.0
  %1727 = vmatpush1.msra.mxu0 0.0
  %1728 = vmatprep.subr.mxu0 0.0
  %1729 = vmatpush1.msra.mxu0 0.0
  %1730 = vmatprep.subr.mxu0 0.0
  %1731 = vmatpush1.msra.mxu0 0.0
  %1732 = vmatprep.subr.mxu0 0.0
  %1733 = vmatpush1.msra.mxu0 0.0
  %1734 = vmatprep.subr.mxu0 0.0
  %1735 = vmatpush1.msra.mxu0 0.0
  %1736 = vmatprep.subr.mxu0 0.0
  %1737 = vmatpush1.msra.mxu0 0.0
  %1738 = vmatprep.subr.mxu0 0.0
  %1739 = vmatpush1.msra.mxu0 0.0
  %1740 = vmatprep.subr.mxu0 0.0
  %1741 = vmatpush1.msra.mxu0 0.0
  %1742 = vmatprep.subr.mxu0 0.0
  %1743 = vmatpush1.msra.mxu0 0.0
  %1744 = vmatprep.subr.mxu0 0.0
  %1745 = vmatpush1.msra.mxu0 0.0
  %1746 = vmatprep.subr.mxu0 0.0
  %1747 = vmatpush1.msra.mxu0 0.0
  %1748 = vmatprep.subr.mxu0 0.0
  %1749 = vmatpush1.msra.mxu0 0.0
  %1750 = vmatprep.subr.mxu0 0.0
  %1751 = vmatpush1.msra.mxu0 0.0
  %1752 = vmatprep.subr.mxu0 0.0
  %1753 = vmatpush1.msra.mxu0 0.0
  %1754 = vmatprep.subr.mxu0 0.0
  %1755 = vmatpush1.msra.mxu0 0.0
  %1756 = vmatprep.subr.mxu0 0.0
  %1757 = vmatpush1.msra.mxu0 0.0
  %1758 = vmatprep.subr.mxu0 0.0
  %1759 = vmatpush1.msra.mxu0 0.0
  %1760 = vmatprep.subr.mxu0 0.0
  %1761 = vmatpush1.msra.mxu0 0.0
  %1762 = vmatprep.subr.mxu0 0.0
  %1763 = vmatpush1.msra.mxu0 0.0
  %1764 = vmatprep.subr.mxu0 0.0
  %1765 = vmatpush1.msra.mxu0 0.0
  %1766 = vmatprep.mubr.f32.mxu0 0.0
  %1767 = vmatmul.mubr.f32.gmra.mrb[0].mxu0 %v1697
  %v1768 = vpop.f32.mrb[0].mxu0
  %v1769 = vadd.f32 0.0, %v1768
  %v1770 = vpop.f32.mrb[0].mxu0
  %1771 = vmatprep.mubr.f32.mxu0 0.0
  %1772 = vmatmul.mubr.f32.gmra.mrb[0].mxu0 %v1700
  %v1773 = vpop.f32.mrb[0].mxu0
  %v1774 = vadd.f32 0.0, %v1773
  %v1775 = vpop.f32.mrb[0].mxu0
  %1776 = vdwg.mxu0
  %v1777 = vadd.f32 %v1682, %v1769
  %v1778 = vadd.f32 %v1687, %v1774
  %v1779 = vld [vmem:[%s6] sm:$0x1]
  %v1780 = vlaneseq
  %v1781 = vshrl.u32 %v1780, 7
  %v1782 = vsub.s32 0, %v1781
  %v1783 = vrot.slane %v1779, %v1782
  %v1784 = vmul.f32 %v1777, %v1783
  %v1785 = vmul.f32 %v1778, %v1783
  %v1786 = vld [vmem:[%s6 + $0x1] sm:$0x1]
  %v1787 = vlaneseq
  %v1788 = vshrl.u32 %v1787, 7
  %v1789 = vsub.s32 0, %v1788
  %v1790 = vrot.slane %v1786, %v1789
  %v1791 = vadd.f32 %v1784, %v1790
  %v1792 = vadd.f32 %v1785, %v1790
  %vm1793 = vcmp.gt.f32.partialorder %v1791, 0.0
  %vm1794 = vcmp.gt.f32.partialorder %v1792, 0.0
  %v1795 = vld [vmem:[%s6 + $0x2] sm:$0x1]
  %v1796 = vlaneseq
  %v1797 = vshrl.u32 %v1796, 7
  %v1798 = vsub.s32 0, %v1797
  %v1799 = vrot.slane %v1795, %v1798
  %v1800 = vmul.f32 %v1799, %v1791
  %v1801 = vmul.f32 %v1799, %v1792
  %v1802 = vsel %vm1793, %v1791, %v1800
  %v1803 = vsel %vm1794, %v1792, %v1801
  %s1804 = scalar_lea.vmem %s9, 16
  %1805 = vst.msk [vmem:[%s1804] sm:$0xff] %vm37, %v1802
  %1806 = vst.msk [vmem:[%s1804 + $0x8] sm:$0xff] %vm37, %v1803
  // Predicated region
  $region30: #{_lambda_.1} parent=0 // pred_check
    _
  $region31: #{_lambda_.1} parent=0 // pred_check_branch
    %1808 = sbr.rel (0) target = $region33
  $region32: #{_lambda_.1} parent=0 // pred_region
    _
  $region33: #{_lambda_.1} parent=0 // pred_fallthru
    _
  // Predicated region
  $region34: #{_lambda_.1} parent=0 // pred_check
    _
  $region35: #{_lambda_.1} parent=0 // pred_check_branch
    %1810 = sbr.rel (0) target = $region37
  $region36: #{_lambda_.1} parent=0 // pred_region
    _
  $region37: #{_lambda_.1} parent=0 // pred_fallthru
    _
  // Predicated region
  $region38: #{_lambda_.1} parent=0 // pred_check
    _
  $region39: #{_lambda_.1} parent=0 // pred_check_branch
    %1812 = sbr.rel (0) target = $region41
  $region40: #{_lambda_.1} parent=0 // pred_region
    _
  $region41: #{_lambda_.1} parent=0 // pred_fallthru
    _
  // Predicated region
  $region42: #{_lambda_.1} parent=0 // pred_check
    _
  $region43: #{_lambda_.1} parent=0 // pred_check_branch
    %1814 = sbr.rel (0) target = $region45
  $region44: #{_lambda_.1} parent=0 // pred_region
    _
  $region45: #{_lambda_.1} parent=0 // pred_fallthru
    _
  // Predicated region
  $region46: #{_lambda_.1} parent=0 // pred_check
    _
  $region47: #{_lambda_.1} parent=0 // pred_check_branch
    %1816 = sbr.rel (0) target = $region49
  $region48: #{_lambda_.1} parent=0 // pred_region
    _
  $region49: #{_lambda_.1} parent=0 // pred_fallthru
    _
  // Predicated region
  $region50: #{_lambda_.1} parent=0 // pred_check
    _
  $region51: #{_lambda_.1} parent=0 // pred_check_branch
    %1818 = sbr.rel (0) target = $region53
  $region52: #{_lambda_.1} parent=0 // pred_region
    _
  $region53: #{_lambda_.1} parent=0 // pred_fallthru
    _

</llo_original>
